<compile_context>
chip_gen: v7x
topology: tpu7x:2x2x1
jax: 0.10.0
libtpu: 0.0.40
codegen_flags: <defaults>
</compile_context>

<pallas_src>
import numpy as np
import jax
import jax.numpy as jnp
from jax.experimental import pallas as pl
from jax.experimental.pallas import tpu as pltpu


NEG_SLOPE = 0.15
LANE = 128


def _leaky_relu(x):
    return jnp.where(x >= 0, x, NEG_SLOPE * x)


def _round_up(n, m):
    return ((n + m - 1) // m) * m


def _nbytes(a):
    return int(a.size) * int(a.dtype.itemsize)


# --------------------------------------------------------------------------
# Kernel
# --------------------------------------------------------------------------
def encoder_kernel(
    x_ref,                    # (TB, input_dim)           activation dtype
    w_in_ref, b_in_ref,       # (input_dim, Hp) cdt, (1, Hp) f32
    w_hid_ref, b_hid_ref,     # (Hp, Hp)        cdt, (1, Hp) f32
    w_head_ref, b_head_ref,   # (Hp, HEADp)     cdt, (1, HEADp) f32   (mean|var fused)
    out_ref,                  # (TB, HEADp)
):
    cdt = w_in_ref.dtype      # MXU operand dtype (bf16 by default, f32 optional)

    x = x_ref[...].astype(cdt)        # no-op if the producer already emits cdt

    # input_fc + LeakyReLU (f32 accumulate, f32 epilogue -- works on v5e too).
    h = jnp.dot(x, w_in_ref[...], preferred_element_type=jnp.float32)
    h = _leaky_relu(h + b_in_ref[...])

    # hidden_fc + LeakyReLU
    h = jnp.dot(h.astype(cdt), w_hid_ref[...], preferred_element_type=jnp.float32)
    h = _leaky_relu(h + b_hid_ref[...])

    # fused [mean_fc | var_fc] head -> one lane-dense store
    out = jnp.dot(h.astype(cdt), w_head_ref[...], preferred_element_type=jnp.float32)
    out_ref[...] = (out + b_head_ref[...]).astype(out_ref.dtype)


# --------------------------------------------------------------------------
# Parameter preparation: fuse the head, pad feature dims to 128 lanes,
# cast weights to the MXU compute dtype (biases stay f32).
# --------------------------------------------------------------------------
def prepare_params(params, *, compute_dtype=jnp.bfloat16):
    input_dim, hidden = params["w_in"].shape
    latent = params["w_mean"].shape[1]
    hp = _round_up(hidden, LANE)
    headp = _round_up(2 * latent, LANE)

    def pad2(a, shape):
        out = jnp.zeros(shape, a.dtype)
        return out.at[: a.shape[0], : a.shape[1]].set(a)

    w_in = pad2(params["w_in"], (input_dim, hp)).astype(compute_dtype)
    b_in = pad2(params["b_in"], (1, hp))                       # f32
    w_hid = pad2(params["w_hid"], (hp, hp)).astype(compute_dtype)
    b_hid = pad2(params["b_hid"], (1, hp))                     # f32

    w_head = jnp.zeros((hp, headp), jnp.float32)
    w_head = w_head.at[:hidden, :latent].set(params["w_mean"])
    w_head = w_head.at[:hidden, latent:2 * latent].set(params["w_var"])
    w_head = w_head.astype(compute_dtype)

    b_head = jnp.zeros((1, headp), jnp.float32)
    b_head = b_head.at[:, :latent].set(params["b_mean"])
    b_head = b_head.at[:, latent:2 * latent].set(params["b_var"])

    return dict(
        w_in=w_in, b_in=b_in,
        w_hid=w_hid, b_hid=b_hid,
        w_head=w_head, b_head=b_head,
        latent_dim=latent,
    )


# --------------------------------------------------------------------------
# Batch-tile selection (per perf review).
# --------------------------------------------------------------------------
def _default_tile_b(B):
    if B <= 16:
        return B                     # single block; grid-step overhead dominates
    kind = ""
    try:
        kind = jax.devices()[0].device_kind.lower()
    except Exception:
        pass
    if "v7" in kind:
        # v7x: 2 TensorCores/chip -> guarantee >= 2 "parallel" grid steps so both
        # cores get work; cap at 256 rows so the f32 `h` intermediate (tile_b x Hp)
        # stays small next to the resident weights in 64 MiB VMEM.
        return min(256, _round_up(pl.cdiv(B, 2), 8))
    # v5e/v6e: single TC (grid is a sequential loop) -> biggest tile up to 256
    # rows: fills the 256-wide MXU on v6e and minimizes per-step overhead.
    return B if B <= 256 else 256


# --------------------------------------------------------------------------
# Wrapper
# --------------------------------------------------------------------------
def encoder_forward(x, prep, *, tile_b=None, out_dtype=None):
    """x: (B, input_dim) f32 or bf16.  prep: output of prepare_params.

    Returns (mean, log_var), each (B, latent_dim) in `out_dtype`
    (defaults to x.dtype)."""
    B, input_dim = x.shape
    latent = prep["latent_dim"]
    hp = prep["w_in"].shape[1]
    headp = prep["w_head"].shape[1]
    out_dtype = x.dtype if out_dtype is None else out_dtype
    out_itemsize = np.dtype(out_dtype).itemsize

    if tile_b is None:
        tile_b = _default_tile_b(B)

    # No wrapper-side jnp.pad: Pallas handles the ragged last batch block
    # (partial reads, masked writes).  Rows are independent, so garbage in the
    # padded rows never touches valid output rows.
    grid = (pl.cdiv(B, tile_b),)

    weight_keys = ("w_in", "b_in", "w_hid", "b_hid", "w_head", "b_head")
    weight_bytes = sum(_nbytes(prep[k]) for k in weight_keys)

    # Scheduler hint: lets XLA overlap the custom call with surrounding ops.
    cost = pl.CostEstimate(
        flops=2 * B * (input_dim * hp + hp * hp + hp * headp),
        transcendentals=0,
        bytes_accessed=_nbytes(x) + weight_bytes + B * headp * out_itemsize,
    )

    def _build(weight_buffers):
        def resident(a):
            # Constant index_map -> block is DMA'd once and stays VMEM-resident.
            if weight_buffers == 1:
                return pl.BlockSpec(a.shape, lambda i: (0, 0),
                                    pipeline_mode=pl.Buffered(1))
            return pl.BlockSpec(a.shape, lambda i: (0, 0))

        in_specs = [
            pl.BlockSpec((tile_b, input_dim), lambda i: (i, 0)),     # x (batch-tiled)
            resident(prep["w_in"]), resident(prep["b_in"]),          # input_fc
            resident(prep["w_hid"]), resident(prep["b_hid"]),        # hidden_fc
            resident(prep["w_head"]), resident(prep["b_head"]),      # fused head
        ]
        out_specs = pl.BlockSpec((tile_b, headp), lambda i: (i, 0))

        # Explicit VMEM budget: weights (x buffer count) + double-buffered x/out
        # blocks + f32 `h` intermediates + slack.
        est = (weight_bytes * weight_buffers
               + 2 * tile_b * input_dim * int(x.dtype.itemsize)
               + 2 * tile_b * headp * out_itemsize
               + 3 * tile_b * hp * 4
               + (4 << 20))
        vmem_limit = int(min(max(est, 32 << 20), 100 << 20))

        return pl.pallas_call(
            encoder_kernel,
            grid=grid,
            in_specs=in_specs,
            out_specs=out_specs,
            out_shape=jax.ShapeDtypeStruct((B, headp), out_dtype),
            compiler_params=pltpu.CompilerParams(
                dimension_semantics=("parallel",),
                vmem_limit_bytes=vmem_limit,
            ),
            cost_estimate=cost,
        )

    args = (x,
            prep["w_in"], prep["b_in"],
            prep["w_hid"], prep["b_hid"],
            prep["w_head"], prep["b_head"])

    try:
        out = _build(1)(*args)       # single-buffered resident weights
    except Exception:
        out = _build(2)(*args)       # fallback: default double-buffering

    mean = out[:, :latent]
    log_var = out[:, latent:2 * latent]
    return mean, log_var


# --------------------------------------------------------------------------
# Init + references
# --------------------------------------------------------------------------
def init_params(key, input_dim, hidden_dim, latent_dim):
    """Deterministic synthetic init. Weights stored as (in, out); biases (1, out)."""
    ks = jax.random.split(key, 8)

    def lin(kw, kb, fan_in, fan_out):
        bound = 1.0 / jnp.sqrt(fan_in)   # torch.nn.Linear default
        w = jax.random.uniform(kw, (fan_in, fan_out), jnp.float32, -bound, bound)
        b = jax.random.uniform(kb, (1, fan_out), jnp.float32, -bound, bound)
        return w, b

    w_in, b_in = lin(ks[0], ks[1], input_dim, hidden_dim)
    w_hid, b_hid = lin(ks[2], ks[3], hidden_dim, hidden_dim)
    w_mean, b_mean = lin(ks[4], ks[5], hidden_dim, latent_dim)
    w_var, b_var = lin(ks[6], ks[7], hidden_dim, latent_dim)
    return dict(
        w_in=w_in, b_in=b_in,
        w_hid=w_hid, b_hid=b_hid,
        w_mean=w_mean, b_mean=b_mean,
        w_var=w_var, b_var=b_var,
    )


def encoder_reference(x, p, *, compute_dtype=jnp.float32):
    """Pure-JAX reference mirroring the PyTorch forward (optionally bf16 matmul operands)."""
    lrelu = lambda v: jnp.where(v >= 0, v, NEG_SLOPE * v)

    def dot(a, w):
        return jnp.dot(a.astype(compute_dtype), w.astype(compute_dtype),
                       preferred_element_type=jnp.float32)

    h = lrelu(dot(x, p["w_in"]) + p["b_in"])
    h = lrelu(dot(h, p["w_hid"]) + p["b_hid"])
    mean = dot(h, p["w_mean"]) + p["b_mean"]
    log_var = dot(h, p["w_var"]) + p["b_var"]
    return mean, log_var


if __name__ == "__main__":
    key = jax.random.PRNGKey(0)
    k_x, k_x2, k_p = jax.random.split(key, 3)

    input_dim, hidden_dim, latent_dim = 32, 32, 8
    params = init_params(k_p, input_dim, hidden_dim, latent_dim)
    prep = prepare_params(params, compute_dtype=jnp.bfloat16)

    def check(x):
        mean, log_var = encoder_forward(x, prep)
        jax.block_until_ready((mean, log_var))
        # Tight check vs. a reference mirroring the kernel's bf16-in / f32-acc numerics.
        m_mx, lv_mx = encoder_reference(x, params, compute_dtype=jnp.bfloat16)
        assert mean.shape == m_mx.shape and log_var.shape == lv_mx.shape
        assert jnp.allclose(mean, m_mx, atol=1e-4, rtol=1e-4)
        assert jnp.allclose(log_var, lv_mx, atol=1e-4, rtol=1e-4)
        # Loose check vs. the exact f32 PyTorch-equivalent forward.
        m_f32, lv_f32 = encoder_reference(x, params, compute_dtype=jnp.float32)
        assert jnp.allclose(mean, m_f32, atol=5e-2, rtol=5e-2)
        assert jnp.allclose(log_var, lv_f32, atol=5e-2, rtol=5e-2)

    # Batch large enough to exercise the tiled path (and 2 parallel steps on v7x).
    check(jax.random.normal(k_x, (256, input_dim), jnp.float32))
    # Ragged batch (not a multiple of 8 or the tile) exercises Pallas edge masking.
    check(jax.random.normal(k_x2, (100, input_dim), jnp.float32))

    print("KERNEL_OK")
</pallas_src>

<mosaic_0001>
module attributes {stable_mosaic.version = 11 : i64} {
  func.func @encoder_kernel(%arg0: i32, %arg1: memref<256x32xf32, #tpu.memory_space<vmem>>, %arg2: memref<32x128xbf16, #tpu.memory_space<vmem>>, %arg3: memref<1x128xf32, #tpu.memory_space<vmem>>, %arg4: memref<128x128xbf16, #tpu.memory_space<vmem>>, %arg5: memref<1x128xf32, #tpu.memory_space<vmem>>, %arg6: memref<128x128xbf16, #tpu.memory_space<vmem>>, %arg7: memref<1x128xf32, #tpu.memory_space<vmem>>, %arg8: memref<256x128xf32, #tpu.memory_space<vmem>>) attributes {dimension_semantics = [#tpu.dimension_semantics<parallel>], iteration_bounds = array<i64: 1>, scalar_prefetch = 0 : i64, scratch_operands = 0 : i64, tpu.core_type = #tpu.core_type<tc>, window_params = [{transform_indices = @transform_0, window_bounds = array<i64: 256, 32>}, {pipeline_mode = #tpu.pipeline_mode<synchronous>, transform_indices = @transform_1, window_bounds = array<i64: 32, 128>}, {pipeline_mode = #tpu.pipeline_mode<synchronous>, transform_indices = @transform_2, window_bounds = array<i64: 1, 128>}, {pipeline_mode = #tpu.pipeline_mode<synchronous>, transform_indices = @transform_3, window_bounds = array<i64: 128, 128>}, {pipeline_mode = #tpu.pipeline_mode<synchronous>, transform_indices = @transform_4, window_bounds = array<i64: 1, 128>}, {pipeline_mode = #tpu.pipeline_mode<synchronous>, transform_indices = @transform_5, window_bounds = array<i64: 128, 128>}, {pipeline_mode = #tpu.pipeline_mode<synchronous>, transform_indices = @transform_6, window_bounds = array<i64: 1, 128>}, {transform_indices = @transform_7, window_bounds = array<i64: 256, 128>}]} {
    %c0 = arith.constant 0 : index
    %c0_0 = arith.constant 0 : index
    %0 = vector.load %arg1[%c0, %c0_0] : memref<256x32xf32, #tpu.memory_space<vmem>>, vector<256x32xf32>
    %1 = arith.truncf %0 : vector<256x32xf32> to vector<256x32xbf16>
    %c0_1 = arith.constant 0 : index
    %c0_2 = arith.constant 0 : index
    %2 = vector.load %arg2[%c0_1, %c0_2] : memref<32x128xbf16, #tpu.memory_space<vmem>>, vector<32x128xbf16>
    %cst = arith.constant dense<0.000000e+00> : vector<256x128xf32>
    %3 = tpu.matmul %1, %2, %cst {dimension_numbers = #tpu.dot_dimension_numbers<[1], [0], [0], [1], [0, 0, 1, 1], [], []>} : vector<256x32xbf16>, vector<32x128xbf16>, vector<256x128xf32> -> vector<256x128xf32>
    %c0_3 = arith.constant 0 : index
    %c0_4 = arith.constant 0 : index
    %4 = vector.load %arg3[%c0_3, %c0_4] : memref<1x128xf32, #tpu.memory_space<vmem>>, vector<1x128xf32>
    %5 = vector.broadcast %4 : vector<1x128xf32> to vector<256x128xf32>
    %6 = arith.addf %3, %5 : vector<256x128xf32>
    %cst_5 = arith.constant 0.000000e+00 : f32
    %7 = vector.broadcast %cst_5 : f32 to vector<256x128xf32>
    %8 = arith.cmpf oge, %6, %7 : vector<256x128xf32>
    %cst_6 = arith.constant 1.500000e-01 : f32
    %9 = vector.broadcast %cst_6 : f32 to vector<256x128xf32>
    %10 = arith.mulf %9, %6 : vector<256x128xf32>
    %11 = arith.select %8, %6, %10 : vector<256x128xi1>, vector<256x128xf32>
    %12 = arith.truncf %11 : vector<256x128xf32> to vector<256x128xbf16>
    %c0_7 = arith.constant 0 : index
    %c0_8 = arith.constant 0 : index
    %13 = vector.load %arg4[%c0_7, %c0_8] : memref<128x128xbf16, #tpu.memory_space<vmem>>, vector<128x128xbf16>
    %cst_9 = arith.constant dense<0.000000e+00> : vector<256x128xf32>
    %14 = tpu.matmul %12, %13, %cst_9 {dimension_numbers = #tpu.dot_dimension_numbers<[1], [0], [0], [1], [0, 0, 1, 1], [], []>} : vector<256x128xbf16>, vector<128x128xbf16>, vector<256x128xf32> -> vector<256x128xf32>
    %c0_10 = arith.constant 0 : index
    %c0_11 = arith.constant 0 : index
    %15 = vector.load %arg5[%c0_10, %c0_11] : memref<1x128xf32, #tpu.memory_space<vmem>>, vector<1x128xf32>
    %16 = vector.broadcast %15 : vector<1x128xf32> to vector<256x128xf32>
    %17 = arith.addf %14, %16 : vector<256x128xf32>
    %cst_12 = arith.constant 0.000000e+00 : f32
    %18 = vector.broadcast %cst_12 : f32 to vector<256x128xf32>
    %19 = arith.cmpf oge, %17, %18 : vector<256x128xf32>
    %cst_13 = arith.constant 1.500000e-01 : f32
    %20 = vector.broadcast %cst_13 : f32 to vector<256x128xf32>
    %21 = arith.mulf %20, %17 : vector<256x128xf32>
    %22 = arith.select %19, %17, %21 : vector<256x128xi1>, vector<256x128xf32>
    %23 = arith.truncf %22 : vector<256x128xf32> to vector<256x128xbf16>
    %c0_14 = arith.constant 0 : index
    %c0_15 = arith.constant 0 : index
    %24 = vector.load %arg6[%c0_14, %c0_15] : memref<128x128xbf16, #tpu.memory_space<vmem>>, vector<128x128xbf16>
    %cst_16 = arith.constant dense<0.000000e+00> : vector<256x128xf32>
    %25 = tpu.matmul %23, %24, %cst_16 {dimension_numbers = #tpu.dot_dimension_numbers<[1], [0], [0], [1], [0, 0, 1, 1], [], []>} : vector<256x128xbf16>, vector<128x128xbf16>, vector<256x128xf32> -> vector<256x128xf32>
    %c0_17 = arith.constant 0 : index
    %c0_18 = arith.constant 0 : index
    %26 = vector.load %arg7[%c0_17, %c0_18] : memref<1x128xf32, #tpu.memory_space<vmem>>, vector<1x128xf32>
    %27 = vector.broadcast %26 : vector<1x128xf32> to vector<256x128xf32>
    %28 = arith.addf %25, %27 : vector<256x128xf32>
    %c0_19 = arith.constant 0 : index
    %c0_20 = arith.constant 0 : index
    %29 = vector.load %arg8[%c0_19, %c0_20] : memref<256x128xf32, #tpu.memory_space<vmem>>, vector<256x128xf32>
    tpu.vector_store %arg8[%c0_19, %c0_20], %28 {strides = array<i32>} : memref<256x128xf32, #tpu.memory_space<vmem>>, vector<256x128xf32>,
    return
  }
  func.func @transform_0(%arg0: i32) -> (i32, i32) {
    %c0_i32 = arith.constant 0 : i32
    %c0_i32_0 = arith.constant 0 : i32
    return %arg0, %c0_i32 : i32, i32
  }
  func.func @transform_1(%arg0: i32) -> (i32, i32) {
    %c0_i32 = arith.constant 0 : i32
    %c0_i32_0 = arith.constant 0 : i32
    %c0_i32_1 = arith.constant 0 : i32
    return %c0_i32, %c0_i32_0 : i32, i32
  }
  func.func @transform_2(%arg0: i32) -> (i32, i32) {
    %c0_i32 = arith.constant 0 : i32
    %c0_i32_0 = arith.constant 0 : i32
    %c0_i32_1 = arith.constant 0 : i32
    return %c0_i32, %c0_i32_0 : i32, i32
  }
  func.func @transform_3(%arg0: i32) -> (i32, i32) {
    %c0_i32 = arith.constant 0 : i32
    %c0_i32_0 = arith.constant 0 : i32
    %c0_i32_1 = arith.constant 0 : i32
    return %c0_i32, %c0_i32_0 : i32, i32
  }
  func.func @transform_4(%arg0: i32) -> (i32, i32) {
    %c0_i32 = arith.constant 0 : i32
    %c0_i32_0 = arith.constant 0 : i32
    %c0_i32_1 = arith.constant 0 : i32
    return %c0_i32, %c0_i32_0 : i32, i32
  }
  func.func @transform_5(%arg0: i32) -> (i32, i32) {
    %c0_i32 = arith.constant 0 : i32
    %c0_i32_0 = arith.constant 0 : i32
    %c0_i32_1 = arith.constant 0 : i32
    return %c0_i32, %c0_i32_0 : i32, i32
  }
  func.func @transform_6(%arg0: i32) -> (i32, i32) {
    %c0_i32 = arith.constant 0 : i32
    %c0_i32_0 = arith.constant 0 : i32
    %c0_i32_1 = arith.constant 0 : i32
    return %c0_i32, %c0_i32_0 : i32, i32
  }
  func.func @transform_7(%arg0: i32) -> (i32, i32) {
    %c0_i32 = arith.constant 0 : i32
    %c0_i32_0 = arith.constant 0 : i32
    return %arg0, %c0_i32 : i32, i32
  }
}

module attributes {stable_mosaic.version = 11 : i64} {
  func.func @encoder_kernel(%arg0: i32, %arg1: memref<256x32xf32, #tpu.memory_space<vmem>>, %arg2: memref<32x128xbf16, #tpu.memory_space<vmem>>, %arg3: memref<1x128xf32, #tpu.memory_space<vmem>>, %arg4: memref<128x128xbf16, #tpu.memory_space<vmem>>, %arg5: memref<1x128xf32, #tpu.memory_space<vmem>>, %arg6: memref<128x128xbf16, #tpu.memory_space<vmem>>, %arg7: memref<1x128xf32, #tpu.memory_space<vmem>>, %arg8: memref<256x128xf32, #tpu.memory_space<vmem>>) attributes {dimension_semantics = [#tpu.dimension_semantics<parallel>], iteration_bounds = array<i64: 1>, scalar_prefetch = 0 : i64, scratch_operands = 0 : i64, tpu.core_type = #tpu.core_type<tc>, window_params = [{transform_indices = @transform_0, window_bounds = array<i64: 256, 32>}, {pipeline_mode = #tpu.pipeline_mode<synchronous>, transform_indices = @transform_1, window_bounds = array<i64: 32, 128>}, {pipeline_mode = #tpu.pipeline_mode<synchronous>, transform_indices = @transform_2, window_bounds = array<i64: 1, 128>}, {pipeline_mode = #tpu.pipeline_mode<synchronous>, transform_indices = @transform_3, window_bounds = array<i64: 128, 128>}, {pipeline_mode = #tpu.pipeline_mode<synchronous>, transform_indices = @transform_4, window_bounds = array<i64: 1, 128>}, {pipeline_mode = #tpu.pipeline_mode<synchronous>, transform_indices = @transform_5, window_bounds = array<i64: 128, 128>}, {pipeline_mode = #tpu.pipeline_mode<synchronous>, transform_indices = @transform_6, window_bounds = array<i64: 1, 128>}, {transform_indices = @transform_7, window_bounds = array<i64: 256, 128>}]} {
    %c0 = arith.constant 0 : index
    %c0_0 = arith.constant 0 : index
    %0 = vector.load %arg1[%c0, %c0_0] : memref<256x32xf32, #tpu.memory_space<vmem>>, vector<256x32xf32>
    %1 = arith.truncf %0 : vector<256x32xf32> to vector<256x32xbf16>
    %c0_1 = arith.constant 0 : index
    %c0_2 = arith.constant 0 : index
    %2 = vector.load %arg2[%c0_1, %c0_2] : memref<32x128xbf16, #tpu.memory_space<vmem>>, vector<32x128xbf16>
    %cst = arith.constant dense<0.000000e+00> : vector<256x128xf32>
    %3 = tpu.matmul %1, %2, %cst {dimension_numbers = #tpu.dot_dimension_numbers<[1], [0], [0], [1], [0, 0, 1, 1], [], []>} : vector<256x32xbf16>, vector<32x128xbf16>, vector<256x128xf32> -> vector<256x128xf32>
    %c0_3 = arith.constant 0 : index
    %c0_4 = arith.constant 0 : index
    %4 = vector.load %arg3[%c0_3, %c0_4] : memref<1x128xf32, #tpu.memory_space<vmem>>, vector<1x128xf32>
    %5 = vector.broadcast %4 : vector<1x128xf32> to vector<256x128xf32>
    %6 = arith.addf %3, %5 : vector<256x128xf32>
    %cst_5 = arith.constant 0.000000e+00 : f32
    %7 = vector.broadcast %cst_5 : f32 to vector<256x128xf32>
    %8 = arith.cmpf oge, %6, %7 : vector<256x128xf32>
    %cst_6 = arith.constant 1.500000e-01 : f32
    %9 = vector.broadcast %cst_6 : f32 to vector<256x128xf32>
    %10 = arith.mulf %9, %6 : vector<256x128xf32>
    %11 = arith.select %8, %6, %10 : vector<256x128xi1>, vector<256x128xf32>
    %12 = arith.truncf %11 : vector<256x128xf32> to vector<256x128xbf16>
    %c0_7 = arith.constant 0 : index
    %c0_8 = arith.constant 0 : index
    %13 = vector.load %arg4[%c0_7, %c0_8] : memref<128x128xbf16, #tpu.memory_space<vmem>>, vector<128x128xbf16>
    %cst_9 = arith.constant dense<0.000000e+00> : vector<256x128xf32>
    %14 = tpu.matmul %12, %13, %cst_9 {dimension_numbers = #tpu.dot_dimension_numbers<[1], [0], [0], [1], [0, 0, 1, 1], [], []>} : vector<256x128xbf16>, vector<128x128xbf16>, vector<256x128xf32> -> vector<256x128xf32>
    %c0_10 = arith.constant 0 : index
    %c0_11 = arith.constant 0 : index
    %15 = vector.load %arg5[%c0_10, %c0_11] : memref<1x128xf32, #tpu.memory_space<vmem>>, vector<1x128xf32>
    %16 = vector.broadcast %15 : vector<1x128xf32> to vector<256x128xf32>
    %17 = arith.addf %14, %16 : vector<256x128xf32>
    %cst_12 = arith.constant 0.000000e+00 : f32
    %18 = vector.broadcast %cst_12 : f32 to vector<256x128xf32>
    %19 = arith.cmpf oge, %17, %18 : vector<256x128xf32>
    %cst_13 = arith.constant 1.500000e-01 : f32
    %20 = vector.broadcast %cst_13 : f32 to vector<256x128xf32>
    %21 = arith.mulf %20, %17 : vector<256x128xf32>
    %22 = arith.select %19, %17, %21 : vector<256x128xi1>, vector<256x128xf32>
    %23 = arith.truncf %22 : vector<256x128xf32> to vector<256x128xbf16>
    %c0_14 = arith.constant 0 : index
    %c0_15 = arith.constant 0 : index
    %24 = vector.load %arg6[%c0_14, %c0_15] : memref<128x128xbf16, #tpu.memory_space<vmem>>, vector<128x128xbf16>
    %cst_16 = arith.constant dense<0.000000e+00> : vector<256x128xf32>
    %25 = tpu.matmul %23, %24, %cst_16 {dimension_numbers = #tpu.dot_dimension_numbers<[1], [0], [0], [1], [0, 0, 1, 1], [], []>} : vector<256x128xbf16>, vector<128x128xbf16>, vector<256x128xf32> -> vector<256x128xf32>
    %c0_17 = arith.constant 0 : index
    %c0_18 = arith.constant 0 : index
    %26 = vector.load %arg7[%c0_17, %c0_18] : memref<1x128xf32, #tpu.memory_space<vmem>>, vector<1x128xf32>
    %27 = vector.broadcast %26 : vector<1x128xf32> to vector<256x128xf32>
    %28 = arith.addf %25, %27 : vector<256x128xf32>
    %c0_19 = arith.constant 0 : index
    %c0_20 = arith.constant 0 : index
    %29 = vector.load %arg8[%c0_19, %c0_20] : memref<256x128xf32, #tpu.memory_space<vmem>>, vector<256x128xf32>
    tpu.vector_store %arg8[%c0_19, %c0_20], %28 {strides = array<i32>} : memref<256x128xf32, #tpu.memory_space<vmem>>, vector<256x128xf32>,
    return
  }
  func.func @transform_0(%arg0: i32) -> (i32, i32) {
    %c0_i32 = arith.constant 0 : i32
    %c0_i32_0 = arith.constant 0 : i32
    return %arg0, %c0_i32 : i32, i32
  }
  func.func @transform_1(%arg0: i32) -> (i32, i32) {
    %c0_i32 = arith.constant 0 : i32
    %c0_i32_0 = arith.constant 0 : i32
    %c0_i32_1 = arith.constant 0 : i32
    return %c0_i32, %c0_i32_0 : i32, i32
  }
  func.func @transform_2(%arg0: i32) -> (i32, i32) {
    %c0_i32 = arith.constant 0 : i32
    %c0_i32_0 = arith.constant 0 : i32
    %c0_i32_1 = arith.constant 0 : i32
    return %c0_i32, %c0_i32_0 : i32, i32
  }
  func.func @transform_3(%arg0: i32) -> (i32, i32) {
    %c0_i32 = arith.constant 0 : i32
    %c0_i32_0 = arith.constant 0 : i32
    %c0_i32_1 = arith.constant 0 : i32
    return %c0_i32, %c0_i32_0 : i32, i32
  }
  func.func @transform_4(%arg0: i32) -> (i32, i32) {
    %c0_i32 = arith.constant 0 : i32
    %c0_i32_0 = arith.constant 0 : i32
    %c0_i32_1 = arith.constant 0 : i32
    return %c0_i32, %c0_i32_0 : i32, i32
  }
  func.func @transform_5(%arg0: i32) -> (i32, i32) {
    %c0_i32 = arith.constant 0 : i32
    %c0_i32_0 = arith.constant 0 : i32
    %c0_i32_1 = arith.constant 0 : i32
    return %c0_i32, %c0_i32_0 : i32, i32
  }
  func.func @transform_6(%arg0: i32) -> (i32, i32) {
    %c0_i32 = arith.constant 0 : i32
    %c0_i32_0 = arith.constant 0 : i32
    %c0_i32_1 = arith.constant 0 : i32
    return %c0_i32, %c0_i32_0 : i32, i32
  }
  func.func @transform_7(%arg0: i32) -> (i32, i32) {
    %c0_i32 = arith.constant 0 : i32
    %c0_i32_0 = arith.constant 0 : i32
    return %arg0, %c0_i32 : i32, i32
  }
}

</mosaic_0001>

<llo_original>
// kernel: tpu_custom_call.1
$region0: #{tpu_custom_call.1}
  #allocation0 [shape = 'u32[]', space=smem, size = 0x4, offset = 0x4, fixed_abs, tag = 'smem constant byte address 0x4 - core index']
  #allocation1 [shape = 'u32[144,128]{1,0:T(1,128)}', space=vmem, size = 0x12000, scoped, tag = 'internal scratch']
  %s0 = inlined_call_operand.vmem [shape: f32[256,32], index: 0, kind: input, shape index: {}]
  %s1 = inlined_call_operand.vmem [shape: bf16[32,128], index: 1, kind: input, shape index: {}]
  %s2 = inlined_call_operand.vmem [shape: f32[1,128], index: 2, kind: input, shape index: {}]
  %s3 = inlined_call_operand.vmem [shape: bf16[128,128], index: 3, kind: input, shape index: {}]
  %s4 = inlined_call_operand.vmem [shape: f32[1,128], index: 4, kind: input, shape index: {}]
  %s5 = inlined_call_operand.vmem [shape: bf16[128,128], index: 5, kind: input, shape index: {}]
  %s6 = inlined_call_operand.vmem [shape: f32[1,128], index: 6, kind: input, shape index: {}]
  %s7 = inlined_call_operand.hbm [shape: f32[256,128], index: 7, kind: output, shape index: {}]
  %s8 = sld [smem:[#allocation0]]
  $region38: #{tpu_custom_call.1} parent=0
    _
  %s10 = ssub.s32 1, %s8
  %s11 = scalar_select 0, %s10, %s8
  $region1: #{tpu_custom_call.1} parent=0
    #allocation2 [shape = 'u8[131072]{0}', space=vmem, size = 0x20000, scoped, tag = 'output window, operand 0, single buffered']
    #allocation3 [shape = 's32[1]{0}', space=sflag, size = 0x4, scoped, tag = 'scoped memory for tpu_custom_call.1']
    %12 = vsyncpa [#allocation3], 0
    // Predicated region
    $region2: #{tpu_custom_call.1} parent=1 // pred_check
      _
    $region3: #{tpu_custom_call.1} parent=1 // pred_check_branch
      %14 = sbr.rel (0) target = $region5
    $region4: #{tpu_custom_call.1} parent=1 // pred_region
      _
    $region5: #{tpu_custom_call.1} parent=1 // pred_fallthru
      _
    // Predicated region
    $region6: #{tpu_custom_call.1} parent=1 // pred_check
      _
    $region7: #{tpu_custom_call.1} parent=1 // pred_check_branch
      %16 = sbr.rel (0) target = $region9
    $region8: #{tpu_custom_call.1} parent=1 // pred_region
      _
    $region9: #{tpu_custom_call.1} parent=1 // pred_fallthru
      _
    // Predicated region
    $region10: #{tpu_custom_call.1} parent=1 // pred_check
      _
    $region11: #{tpu_custom_call.1} parent=1 // pred_check_branch
      %18 = sbr.rel (0) target = $region13
    $region12: #{tpu_custom_call.1} parent=1 // pred_region
      _
    $region13: #{tpu_custom_call.1} parent=1 // pred_fallthru
      _
    // Predicated region
    $region14: #{tpu_custom_call.1} parent=1 // pred_check
      _
    $region15: #{tpu_custom_call.1} parent=1 // pred_check_branch
      %20 = sbr.rel (0) target = $region17
    $region16: #{tpu_custom_call.1} parent=1 // pred_region
      _
    $region17: #{tpu_custom_call.1} parent=1 // pred_fallthru
      _
    // Predicated region
    $region18: #{tpu_custom_call.1} parent=1 // pred_check
      _
    $region19: #{tpu_custom_call.1} parent=1 // pred_check_branch
      %22 = sbr.rel (0) target = $region21
    $region20: #{tpu_custom_call.1} parent=1 // pred_region
      _
    $region21: #{tpu_custom_call.1} parent=1 // pred_fallthru
      _
    // Predicated region
    $region22: #{tpu_custom_call.1} parent=1 // pred_check
      _
    $region23: #{tpu_custom_call.1} parent=1 // pred_check_branch
      %24 = sbr.rel (0) target = $region25
    $region24: #{tpu_custom_call.1} parent=1 // pred_region
      _
    $region25: #{tpu_custom_call.1} parent=1 // pred_fallthru
      _
    // Predicated region
    $region26: #{tpu_custom_call.1} parent=1 // pred_check
      _
    $region27: #{tpu_custom_call.1} parent=1 // pred_check_branch
      %26 = sbr.rel (0) target = $region29
    $region28: #{tpu_custom_call.1} parent=1 // pred_region
      _
    $region29: #{tpu_custom_call.1} parent=1 // pred_fallthru
      _
    %v28 = vld [vmem:[%s0] sm:$0xff]
    %v29 = vld [vmem:[%s0 + $0x8] sm:$0xff]
    %v30 = vld [vmem:[%s0 + $0x10] sm:$0xff]
    %v31 = vld [vmem:[%s0 + $0x18] sm:$0xff]
    %v32 = vld [vmem:[%s0 + $0x20] sm:$0xff]
    %v33 = vld [vmem:[%s0 + $0x28] sm:$0xff]
    %v34 = vld [vmem:[%s0 + $0x30] sm:$0xff]
    %v35 = vld [vmem:[%s0 + $0x38] sm:$0xff]
    %v36 = vld [vmem:[%s0 + $0x40] sm:$0xff]
    %v37 = vld [vmem:[%s0 + $0x48] sm:$0xff]
    %v38 = vld [vmem:[%s0 + $0x50] sm:$0xff]
    %v39 = vld [vmem:[%s0 + $0x58] sm:$0xff]
    %v40 = vld [vmem:[%s0 + $0x60] sm:$0xff]
    %v41 = vld [vmem:[%s0 + $0x68] sm:$0xff]
    %v42 = vld [vmem:[%s0 + $0x70] sm:$0xff]
    %v43 = vld [vmem:[%s0 + $0x78] sm:$0xff]
    %v44 = vld [vmem:[%s0 + $0x80] sm:$0xff]
    %v45 = vld [vmem:[%s0 + $0x88] sm:$0xff]
    %v46 = vld [vmem:[%s0 + $0x90] sm:$0xff]
    %v47 = vld [vmem:[%s0 + $0x98] sm:$0xff]
    %v48 = vld [vmem:[%s0 + $0xa0] sm:$0xff]
    %v49 = vld [vmem:[%s0 + $0xa8] sm:$0xff]
    %v50 = vld [vmem:[%s0 + $0xb0] sm:$0xff]
    %v51 = vld [vmem:[%s0 + $0xb8] sm:$0xff]
    %v52 = vld [vmem:[%s0 + $0xc0] sm:$0xff]
    %v53 = vld [vmem:[%s0 + $0xc8] sm:$0xff]
    %v54 = vld [vmem:[%s0 + $0xd0] sm:$0xff]
    %v55 = vld [vmem:[%s0 + $0xd8] sm:$0xff]
    %v56 = vld [vmem:[%s0 + $0xe0] sm:$0xff]
    %v57 = vld [vmem:[%s0 + $0xe8] sm:$0xff]
    %v58 = vld [vmem:[%s0 + $0xf0] sm:$0xff]
    %v59 = vld [vmem:[%s0 + $0xf8] sm:$0xff]
    %v60 = vpack.c.bf16 %v29, %v28
    %v61 = vpack.c.bf16 %v31, %v30
    %v62 = vpack.c.bf16 %v33, %v32
    %v63 = vpack.c.bf16 %v35, %v34
    %v64 = vpack.c.bf16 %v37, %v36
    %v65 = vpack.c.bf16 %v39, %v38
    %v66 = vpack.c.bf16 %v41, %v40
    %v67 = vpack.c.bf16 %v43, %v42
    %v68 = vpack.c.bf16 %v45, %v44
    %v69 = vpack.c.bf16 %v47, %v46
    %v70 = vpack.c.bf16 %v49, %v48
    %v71 = vpack.c.bf16 %v51, %v50
    %v72 = vpack.c.bf16 %v53, %v52
    %v73 = vpack.c.bf16 %v55, %v54
    %v74 = vpack.c.bf16 %v57, %v56
    %v75 = vpack.c.bf16 %v59, %v58
    %v76 = vld [vmem:[%s1] sm:$0xf]
    %v77 = vld [vmem:[%s1 + $0x4] sm:$0xf]
    %v78 = vld [vmem:[%s1 + $0x8] sm:$0xf]
    %v79 = vld [vmem:[%s1 + $0xc] sm:$0xf]
    %v80 = vld [vmem:[%s2] sm:$0x1]
    %v82 = vlaneseq
    %v83 = vshrl.u32 %v82, 7
    %v84 = vsub.s32 0, %v83
    %v85 = vrot.slane %v80, %v84
    %v91 = vunpack.c.l.b16 %v76
    %v92 = vunpack.c.l.b16 %v77
    %v93 = vunpack.c.l.b16 %v78
    %v94 = vunpack.c.l.b16 %v79
    %v95 = vpack.c.b16 %v92, %v91
    %v96 = vpack.c.b16 %v94, %v93
    %vm99 = vcmask 261120
    %v101 = vsel %vm99, %v60, 0
    %v104 = vsel %vm99, %v61, 0
    %v107 = vsel %vm99, %v62, 0
    %v110 = vsel %vm99, %v63, 0
    %v113 = vsel %vm99, %v64, 0
    %v116 = vsel %vm99, %v65, 0
    %v119 = vsel %vm99, %v66, 0
    %v122 = vsel %vm99, %v67, 0
    %v125 = vsel %vm99, %v68, 0
    %v128 = vsel %vm99, %v69, 0
    %v131 = vsel %vm99, %v70, 0
    %v134 = vsel %vm99, %v71, 0
    %v137 = vsel %vm99, %v72, 0
    %v140 = vsel %vm99, %v73, 0
    %v143 = vsel %vm99, %v74, 0
    %v146 = vsel %vm99, %v75, 0
    %148 = vmatprep.subr.bf16.mxu0 0
    %149 = vmatpush1.bf16.msra.mxu0 %v95
    %150 = vmatprep.subr.bf16.mxu0 0
    %151 = vmatpush1.bf16.msra.mxu0 %v96
    %152 = vmatprep.subr.bf16.mxu0 0
    %153 = vmatpush1.bf16.msra.mxu0 0
    %154 = vmatprep.subr.bf16.mxu0 0
    %155 = vmatpush1.bf16.msra.mxu0 0
    %156 = vmatprep.subr.bf16.mxu0 0
    %157 = vmatpush1.bf16.msra.mxu0 0
    %158 = vmatprep.subr.bf16.mxu0 0
    %159 = vmatpush1.bf16.msra.mxu0 0
    %160 = vmatprep.subr.bf16.mxu0 0
    %161 = vmatpush1.bf16.msra.mxu0 0
    %162 = vmatprep.subr.bf16.mxu0 0
    %163 = vmatpush1.bf16.msra.mxu0 0
    %164 = vmatprep.subr.bf16.mxu0 0
    %165 = vmatpush1.bf16.msra.mxu0 0
    %166 = vmatprep.subr.bf16.mxu0 0
    %167 = vmatpush1.bf16.msra.mxu0 0
    %168 = vmatprep.subr.bf16.mxu0 0
    %169 = vmatpush1.bf16.msra.mxu0 0
    %170 = vmatprep.subr.bf16.mxu0 0
    %171 = vmatpush1.bf16.msra.mxu0 0
    %172 = vmatprep.subr.bf16.mxu0 0
    %173 = vmatpush1.bf16.msra.mxu0 0
    %174 = vmatprep.subr.bf16.mxu0 0
    %175 = vmatpush1.bf16.msra.mxu0 0
    %176 = vmatprep.subr.bf16.mxu0 0
    %177 = vmatpush1.bf16.msra.mxu0 0
    %178 = vmatprep.subr.bf16.mxu0 0
    %179 = vmatpush1.bf16.msra.mxu0 0
    %180 = vmatprep.mubr.bf16.mxu0 0
    %181 = vmatmul.mubr.bf16.gmra.mrb[0].mxu0 %v101
    %v182 = vpop.f32.mrb[0].mxu0
    %v183 = vadd.f32 %v85, %v182
    %v184 = vpop.f32.mrb[0].mxu0
    %v185 = vpop.f32.mrb[0].mxu0
    %v186 = vadd.f32 %v85, %v185
    %v187 = vpop.f32.mrb[0].mxu0
    %188 = vmatprep.mubr.bf16.mxu0 0
    %189 = vmatmul.mubr.bf16.gmra.mrb[0].mxu0 %v104
    %v190 = vpop.f32.mrb[0].mxu0
    %v191 = vadd.f32 %v85, %v190
    %v192 = vpop.f32.mrb[0].mxu0
    %v193 = vpop.f32.mrb[0].mxu0
    %v194 = vadd.f32 %v85, %v193
    %v195 = vpop.f32.mrb[0].mxu0
    %196 = vmatprep.mubr.bf16.mxu0 0
    %197 = vmatmul.mubr.bf16.gmra.mrb[0].mxu0 %v107
    %v198 = vpop.f32.mrb[0].mxu0
    %v199 = vadd.f32 %v85, %v198
    %v200 = vpop.f32.mrb[0].mxu0
    %v201 = vpop.f32.mrb[0].mxu0
    %v202 = vadd.f32 %v85, %v201
    %v203 = vpop.f32.mrb[0].mxu0
    %204 = vmatprep.mubr.bf16.mxu0 0
    %205 = vmatmul.mubr.bf16.gmra.mrb[0].mxu0 %v110
    %v206 = vpop.f32.mrb[0].mxu0
    %v207 = vadd.f32 %v85, %v206
    %v208 = vpop.f32.mrb[0].mxu0
    %v209 = vpop.f32.mrb[0].mxu0
    %v210 = vadd.f32 %v85, %v209
    %v211 = vpop.f32.mrb[0].mxu0
    %212 = vmatprep.mubr.bf16.mxu0 0
    %213 = vmatmul.mubr.bf16.gmra.mrb[0].mxu0 %v113
    %v214 = vpop.f32.mrb[0].mxu0
    %v215 = vadd.f32 %v85, %v214
    %v216 = vpop.f32.mrb[0].mxu0
    %v217 = vpop.f32.mrb[0].mxu0
    %v218 = vadd.f32 %v85, %v217
    %v219 = vpop.f32.mrb[0].mxu0
    %220 = vmatprep.mubr.bf16.mxu0 0
    %221 = vmatmul.mubr.bf16.gmra.mrb[0].mxu0 %v116
    %v222 = vpop.f32.mrb[0].mxu0
    %v223 = vadd.f32 %v85, %v222
    %v224 = vpop.f32.mrb[0].mxu0
    %v225 = vpop.f32.mrb[0].mxu0
    %v226 = vadd.f32 %v85, %v225
    %v227 = vpop.f32.mrb[0].mxu0
    %228 = vmatprep.mubr.bf16.mxu0 0
    %229 = vmatmul.mubr.bf16.gmra.mrb[0].mxu0 %v119
    %v230 = vpop.f32.mrb[0].mxu0
    %v231 = vadd.f32 %v85, %v230
    %v232 = vpop.f32.mrb[0].mxu0
    %v233 = vpop.f32.mrb[0].mxu0
    %v234 = vadd.f32 %v85, %v233
    %v235 = vpop.f32.mrb[0].mxu0
    %236 = vmatprep.mubr.bf16.mxu0 0
    %237 = vmatmul.mubr.bf16.gmra.mrb[0].mxu0 %v122
    %v238 = vpop.f32.mrb[0].mxu0
    %v239 = vadd.f32 %v85, %v238
    %v240 = vpop.f32.mrb[0].mxu0
    %v241 = vpop.f32.mrb[0].mxu0
    %v242 = vadd.f32 %v85, %v241
    %v243 = vpop.f32.mrb[0].mxu0
    %244 = vmatprep.mubr.bf16.mxu0 0
    %245 = vmatmul.mubr.bf16.gmra.mrb[0].mxu0 %v125
    %v246 = vpop.f32.mrb[0].mxu0
    %v247 = vadd.f32 %v85, %v246
    %v248 = vpop.f32.mrb[0].mxu0
    %v249 = vpop.f32.mrb[0].mxu0
    %v250 = vadd.f32 %v85, %v249
    %v251 = vpop.f32.mrb[0].mxu0
    %252 = vmatprep.mubr.bf16.mxu0 0
    %253 = vmatmul.mubr.bf16.gmra.mrb[0].mxu0 %v128
    %v254 = vpop.f32.mrb[0].mxu0
    %v255 = vadd.f32 %v85, %v254
    %v256 = vpop.f32.mrb[0].mxu0
    %v257 = vpop.f32.mrb[0].mxu0
    %v258 = vadd.f32 %v85, %v257
    %v259 = vpop.f32.mrb[0].mxu0
    %260 = vmatprep.mubr.bf16.mxu0 0
    %261 = vmatmul.mubr.bf16.gmra.mrb[0].mxu0 %v131
    %v262 = vpop.f32.mrb[0].mxu0
    %v263 = vadd.f32 %v85, %v262
    %v264 = vpop.f32.mrb[0].mxu0
    %v265 = vpop.f32.mrb[0].mxu0
    %v266 = vadd.f32 %v85, %v265
    %v267 = vpop.f32.mrb[0].mxu0
    %268 = vmatprep.mubr.bf16.mxu0 0
    %269 = vmatmul.mubr.bf16.gmra.mrb[0].mxu0 %v134
    %v270 = vpop.f32.mrb[0].mxu0
    %v271 = vadd.f32 %v85, %v270
    %v272 = vpop.f32.mrb[0].mxu0
    %v273 = vpop.f32.mrb[0].mxu0
    %v274 = vadd.f32 %v85, %v273
    %v275 = vpop.f32.mrb[0].mxu0
    %276 = vmatprep.mubr.bf16.mxu0 0
    %277 = vmatmul.mubr.bf16.gmra.mrb[0].mxu0 %v137
    %v278 = vpop.f32.mrb[0].mxu0
    %v279 = vadd.f32 %v85, %v278
    %v280 = vpop.f32.mrb[0].mxu0
    %v281 = vpop.f32.mrb[0].mxu0
    %v282 = vadd.f32 %v85, %v281
    %v283 = vpop.f32.mrb[0].mxu0
    %284 = vmatprep.mubr.bf16.mxu0 0
    %285 = vmatmul.mubr.bf16.gmra.mrb[0].mxu0 %v140
    %v286 = vpop.f32.mrb[0].mxu0
    %v287 = vadd.f32 %v85, %v286
    %v288 = vpop.f32.mrb[0].mxu0
    %v289 = vpop.f32.mrb[0].mxu0
    %v290 = vadd.f32 %v85, %v289
    %v291 = vpop.f32.mrb[0].mxu0
    %292 = vmatprep.mubr.bf16.mxu0 0
    %293 = vmatmul.mubr.bf16.gmra.mrb[0].mxu0 %v143
    %v294 = vpop.f32.mrb[0].mxu0
    %v295 = vadd.f32 %v85, %v294
    %v296 = vpop.f32.mrb[0].mxu0
    %v297 = vpop.f32.mrb[0].mxu0
    %v298 = vadd.f32 %v85, %v297
    %v299 = vpop.f32.mrb[0].mxu0
    %300 = vmatprep.mubr.bf16.mxu0 0
    %301 = vmatmul.mubr.bf16.gmra.mrb[0].mxu0 %v146
    %v302 = vpop.f32.mrb[0].mxu0
    %v303 = vadd.f32 %v85, %v302
    %v304 = vpop.f32.mrb[0].mxu0
    %v305 = vpop.f32.mrb[0].mxu0
    %v306 = vadd.f32 %v85, %v305
    %v307 = vpop.f32.mrb[0].mxu0
    %308 = vdwg.mxu0
    %vm309 = vcmp.ge.f32.partialorder %v183, 0.0
    %vm310 = vcmp.ge.f32.partialorder %v186, 0.0
    %vm311 = vcmp.ge.f32.partialorder %v191, 0.0
    %vm312 = vcmp.ge.f32.partialorder %v194, 0.0
    %vm313 = vcmp.ge.f32.partialorder %v199, 0.0
    %vm314 = vcmp.ge.f32.partialorder %v202, 0.0
    %vm315 = vcmp.ge.f32.partialorder %v207, 0.0
    %vm316 = vcmp.ge.f32.partialorder %v210, 0.0
    %vm317 = vcmp.ge.f32.partialorder %v215, 0.0
    %vm318 = vcmp.ge.f32.partialorder %v218, 0.0
    %vm319 = vcmp.ge.f32.partialorder %v223, 0.0
    %vm320 = vcmp.ge.f32.partialorder %v226, 0.0
    %vm321 = vcmp.ge.f32.partialorder %v231, 0.0
    %vm322 = vcmp.ge.f32.partialorder %v234, 0.0
    %vm323 = vcmp.ge.f32.partialorder %v239, 0.0
    %vm324 = vcmp.ge.f32.partialorder %v242, 0.0
    %vm325 = vcmp.ge.f32.partialorder %v247, 0.0
    %vm326 = vcmp.ge.f32.partialorder %v250, 0.0
    %vm327 = vcmp.ge.f32.partialorder %v255, 0.0
    %vm328 = vcmp.ge.f32.partialorder %v258, 0.0
    %vm329 = vcmp.ge.f32.partialorder %v263, 0.0
    %vm330 = vcmp.ge.f32.partialorder %v266, 0.0
    %vm331 = vcmp.ge.f32.partialorder %v271, 0.0
    %vm332 = vcmp.ge.f32.partialorder %v274, 0.0
    %vm333 = vcmp.ge.f32.partialorder %v279, 0.0
    %vm334 = vcmp.ge.f32.partialorder %v282, 0.0
    %vm335 = vcmp.ge.f32.partialorder %v287, 0.0
    %vm336 = vcmp.ge.f32.partialorder %v290, 0.0
    %vm337 = vcmp.ge.f32.partialorder %v295, 0.0
    %vm338 = vcmp.ge.f32.partialorder %v298, 0.0
    %vm339 = vcmp.ge.f32.partialorder %v303, 0.0
    %vm340 = vcmp.ge.f32.partialorder %v306, 0.0
    %v341 = vmul.f32 %v183, 0.15
    %v342 = vmul.f32 %v186, 0.15
    %v343 = vmul.f32 %v191, 0.15
    %v344 = vmul.f32 %v194, 0.15
    %v345 = vmul.f32 %v199, 0.15
    %v346 = vmul.f32 %v202, 0.15
    %v347 = vmul.f32 %v207, 0.15
    %v348 = vmul.f32 %v210, 0.15
    %v349 = vmul.f32 %v215, 0.15
    %v350 = vmul.f32 %v218, 0.15
    %v351 = vmul.f32 %v223, 0.15
    %v352 = vmul.f32 %v226, 0.15
    %v353 = vmul.f32 %v231, 0.15
    %v354 = vmul.f32 %v234, 0.15
    %v355 = vmul.f32 %v239, 0.15
    %v356 = vmul.f32 %v242, 0.15
    %v357 = vmul.f32 %v247, 0.15
    %v358 = vmul.f32 %v250, 0.15
    %v359 = vmul.f32 %v255, 0.15
    %v360 = vmul.f32 %v258, 0.15
    %v361 = vmul.f32 %v263, 0.15
    %v362 = vmul.f32 %v266, 0.15
    %v363 = vmul.f32 %v271, 0.15
    %v364 = vmul.f32 %v274, 0.15
    %v365 = vmul.f32 %v279, 0.15
    %v366 = vmul.f32 %v282, 0.15
    %v367 = vmul.f32 %v287, 0.15
    %v368 = vmul.f32 %v290, 0.15
    %v369 = vmul.f32 %v295, 0.15
    %v370 = vmul.f32 %v298, 0.15
    %v371 = vmul.f32 %v303, 0.15
    %v372 = vmul.f32 %v306, 0.15
    %v373 = vsel %vm309, %v183, %v341
    %v374 = vsel %vm310, %v186, %v342
    %v375 = vsel %vm311, %v191, %v343
    %v376 = vsel %vm312, %v194, %v344
    %v377 = vsel %vm313, %v199, %v345
    %v378 = vsel %vm314, %v202, %v346
    %v379 = vsel %vm315, %v207, %v347
    %v380 = vsel %vm316, %v210, %v348
    %v381 = vsel %vm317, %v215, %v349
    %v382 = vsel %vm318, %v218, %v350
    %v383 = vsel %vm319, %v223, %v351
    %v384 = vsel %vm320, %v226, %v352
    %v385 = vsel %vm321, %v231, %v353
    %v386 = vsel %vm322, %v234, %v354
    %v387 = vsel %vm323, %v239, %v355
    %v388 = vsel %vm324, %v242, %v356
    %v389 = vsel %vm325, %v247, %v357
    %v390 = vsel %vm326, %v250, %v358
    %v391 = vsel %vm327, %v255, %v359
    %v392 = vsel %vm328, %v258, %v360
    %v393 = vsel %vm329, %v263, %v361
    %v394 = vsel %vm330, %v266, %v362
    %v395 = vsel %vm331, %v271, %v363
    %v396 = vsel %vm332, %v274, %v364
    %v397 = vsel %vm333, %v279, %v365
    %v398 = vsel %vm334, %v282, %v366
    %v399 = vsel %vm335, %v287, %v367
    %v400 = vsel %vm336, %v290, %v368
    %v401 = vsel %vm337, %v295, %v369
    %v402 = vsel %vm338, %v298, %v370
    %v403 = vsel %vm339, %v303, %v371
    %v404 = vsel %vm340, %v306, %v372
    %v405 = vpack.c.bf16 %v374, %v373
    %v406 = vpack.c.bf16 %v376, %v375
    %v407 = vpack.c.bf16 %v378, %v377
    %v408 = vpack.c.bf16 %v380, %v379
    %v409 = vpack.c.bf16 %v382, %v381
    %v410 = vpack.c.bf16 %v384, %v383
    %v411 = vpack.c.bf16 %v386, %v385
    %v412 = vpack.c.bf16 %v388, %v387
    %v413 = vpack.c.bf16 %v390, %v389
    %v414 = vpack.c.bf16 %v392, %v391
    %v415 = vpack.c.bf16 %v394, %v393
    %v416 = vpack.c.bf16 %v396, %v395
    %v417 = vpack.c.bf16 %v398, %v397
    %v418 = vpack.c.bf16 %v400, %v399
    %v419 = vpack.c.bf16 %v402, %v401
    %v420 = vpack.c.bf16 %v404, %v403
    %v421 = vld [vmem:[%s3] sm:$0xf]
    %v422 = vld [vmem:[%s3 + $0x4] sm:$0xf]
    %v423 = vld [vmem:[%s3 + $0x8] sm:$0xf]
    %v424 = vld [vmem:[%s3 + $0xc] sm:$0xf]
    %v425 = vld [vmem:[%s3 + $0x10] sm:$0xf]
    %v426 = vld [vmem:[%s3 + $0x14] sm:$0xf]
    %v427 = vld [vmem:[%s3 + $0x18] sm:$0xf]
    %v428 = vld [vmem:[%s3 + $0x1c] sm:$0xf]
    %v429 = vld [vmem:[%s3 + $0x20] sm:$0xf]
    %v430 = vld [vmem:[%s3 + $0x24] sm:$0xf]
    %v431 = vld [vmem:[%s3 + $0x28] sm:$0xf]
    %v432 = vld [vmem:[%s3 + $0x2c] sm:$0xf]
    %v433 = vld [vmem:[%s3 + $0x30] sm:$0xf]
    %v434 = vld [vmem:[%s3 + $0x34] sm:$0xf]
    %v435 = vld [vmem:[%s3 + $0x38] sm:$0xf]
    %v436 = vld [vmem:[%s3 + $0x3c] sm:$0xf]
    %v437 = vld [vmem:[%s4] sm:$0x1]
    %v439 = vlaneseq
    %v440 = vshrl.u32 %v439, 7
    %v441 = vsub.s32 0, %v440
    %v442 = vrot.slane %v437, %v441
    %v460 = vunpack.c.l.b16 %v421
    %v461 = vunpack.c.l.b16 %v422
    %v462 = vunpack.c.l.b16 %v423
    %v463 = vunpack.c.l.b16 %v424
    %v464 = vunpack.c.l.b16 %v425
    %v465 = vunpack.c.l.b16 %v426
    %v466 = vunpack.c.l.b16 %v427
    %v467 = vunpack.c.l.b16 %v428
    %v468 = vunpack.c.l.b16 %v429
    %v469 = vunpack.c.l.b16 %v430
    %v470 = vunpack.c.l.b16 %v431
    %v471 = vunpack.c.l.b16 %v432
    %v472 = vunpack.c.l.b16 %v433
    %v473 = vunpack.c.l.b16 %v434
    %v474 = vunpack.c.l.b16 %v435
    %v475 = vunpack.c.l.b16 %v436
    %v476 = vpack.c.b16 %v461, %v460
    %v477 = vpack.c.b16 %v463, %v462
    %v478 = vpack.c.b16 %v465, %v464
    %v479 = vpack.c.b16 %v467, %v466
    %v480 = vpack.c.b16 %v469, %v468
    %v481 = vpack.c.b16 %v471, %v470
    %v482 = vpack.c.b16 %v473, %v472
    %v483 = vpack.c.b16 %v475, %v474
    %492 = vmatprep.subr.bf16.mxu0 0
    %493 = vmatpush1.bf16.msra.mxu0 %v476
    %494 = vmatprep.subr.bf16.mxu0 0
    %495 = vmatpush1.bf16.msra.mxu0 %v477
    %496 = vmatprep.subr.bf16.mxu0 0
    %497 = vmatpush1.bf16.msra.mxu0 %v478
    %498 = vmatprep.subr.bf16.mxu0 0
    %499 = vmatpush1.bf16.msra.mxu0 %v479
    %500 = vmatprep.subr.bf16.mxu0 0
    %501 = vmatpush1.bf16.msra.mxu0 %v480
    %502 = vmatprep.subr.bf16.mxu0 0
    %503 = vmatpush1.bf16.msra.mxu0 %v481
    %504 = vmatprep.subr.bf16.mxu0 0
    %505 = vmatpush1.bf16.msra.mxu0 %v482
    %506 = vmatprep.subr.bf16.mxu0 0
    %507 = vmatpush1.bf16.msra.mxu0 %v483
    %508 = vmatprep.subr.bf16.mxu0 0
    %509 = vmatpush1.bf16.msra.mxu0 0
    %510 = vmatprep.subr.bf16.mxu0 0
    %511 = vmatpush1.bf16.msra.mxu0 0
    %512 = vmatprep.subr.bf16.mxu0 0
    %513 = vmatpush1.bf16.msra.mxu0 0
    %514 = vmatprep.subr.bf16.mxu0 0
    %515 = vmatpush1.bf16.msra.mxu0 0
    %516 = vmatprep.subr.bf16.mxu0 0
    %517 = vmatpush1.bf16.msra.mxu0 0
    %518 = vmatprep.subr.bf16.mxu0 0
    %519 = vmatpush1.bf16.msra.mxu0 0
    %520 = vmatprep.subr.bf16.mxu0 0
    %521 = vmatpush1.bf16.msra.mxu0 0
    %522 = vmatprep.subr.bf16.mxu0 0
    %523 = vmatpush1.bf16.msra.mxu0 0
    %524 = vmatprep.mubr.bf16.mxu0 0
    %525 = vmatmul.mubr.bf16.gmra.mrb[0].mxu0 %v405
    %v526 = vpop.f32.mrb[0].mxu0
    %v527 = vadd.f32 %v442, %v526
    %v528 = vpop.f32.mrb[0].mxu0
    %v529 = vpop.f32.mrb[0].mxu0
    %v530 = vadd.f32 %v442, %v529
    %v531 = vpop.f32.mrb[0].mxu0
    %532 = vmatprep.mubr.bf16.mxu0 0
    %533 = vmatmul.mubr.bf16.gmra.mrb[0].mxu0 %v406
    %v534 = vpop.f32.mrb[0].mxu0
    %v535 = vadd.f32 %v442, %v534
    %v536 = vpop.f32.mrb[0].mxu0
    %v537 = vpop.f32.mrb[0].mxu0
    %v538 = vadd.f32 %v442, %v537
    %v539 = vpop.f32.mrb[0].mxu0
    %540 = vmatprep.mubr.bf16.mxu0 0
    %541 = vmatmul.mubr.bf16.gmra.mrb[0].mxu0 %v407
    %v542 = vpop.f32.mrb[0].mxu0
    %v543 = vadd.f32 %v442, %v542
    %v544 = vpop.f32.mrb[0].mxu0
    %v545 = vpop.f32.mrb[0].mxu0
    %v546 = vadd.f32 %v442, %v545
    %v547 = vpop.f32.mrb[0].mxu0
    %548 = vmatprep.mubr.bf16.mxu0 0
    %549 = vmatmul.mubr.bf16.gmra.mrb[0].mxu0 %v408
    %v550 = vpop.f32.mrb[0].mxu0
    %v551 = vadd.f32 %v442, %v550
    %v552 = vpop.f32.mrb[0].mxu0
    %v553 = vpop.f32.mrb[0].mxu0
    %v554 = vadd.f32 %v442, %v553
    %v555 = vpop.f32.mrb[0].mxu0
    %556 = vmatprep.mubr.bf16.mxu0 0
    %557 = vmatmul.mubr.bf16.gmra.mrb[0].mxu0 %v409
    %v558 = vpop.f32.mrb[0].mxu0
    %v559 = vadd.f32 %v442, %v558
    %v560 = vpop.f32.mrb[0].mxu0
    %v561 = vpop.f32.mrb[0].mxu0
    %v562 = vadd.f32 %v442, %v561
    %v563 = vpop.f32.mrb[0].mxu0
    %564 = vmatprep.mubr.bf16.mxu0 0
    %565 = vmatmul.mubr.bf16.gmra.mrb[0].mxu0 %v410
    %v566 = vpop.f32.mrb[0].mxu0
    %v567 = vadd.f32 %v442, %v566
    %v568 = vpop.f32.mrb[0].mxu0
    %v569 = vpop.f32.mrb[0].mxu0
    %v570 = vadd.f32 %v442, %v569
    %v571 = vpop.f32.mrb[0].mxu0
    %572 = vmatprep.mubr.bf16.mxu0 0
    %573 = vmatmul.mubr.bf16.gmra.mrb[0].mxu0 %v411
    %v574 = vpop.f32.mrb[0].mxu0
    %v575 = vadd.f32 %v442, %v574
    %v576 = vpop.f32.mrb[0].mxu0
    %v577 = vpop.f32.mrb[0].mxu0
    %v578 = vadd.f32 %v442, %v577
    %v579 = vpop.f32.mrb[0].mxu0
    %580 = vmatprep.mubr.bf16.mxu0 0
    %581 = vmatmul.mubr.bf16.gmra.mrb[0].mxu0 %v412
    %v582 = vpop.f32.mrb[0].mxu0
    %v583 = vadd.f32 %v442, %v582
    %v584 = vpop.f32.mrb[0].mxu0
    %v585 = vpop.f32.mrb[0].mxu0
    %v586 = vadd.f32 %v442, %v585
    %v587 = vpop.f32.mrb[0].mxu0
    %588 = vmatprep.mubr.bf16.mxu0 0
    %589 = vmatmul.mubr.bf16.gmra.mrb[0].mxu0 %v413
    %v590 = vpop.f32.mrb[0].mxu0
    %v591 = vadd.f32 %v442, %v590
    %v592 = vpop.f32.mrb[0].mxu0
    %v593 = vpop.f32.mrb[0].mxu0
    %v594 = vadd.f32 %v442, %v593
    %v595 = vpop.f32.mrb[0].mxu0
    %596 = vmatprep.mubr.bf16.mxu0 0
    %597 = vmatmul.mubr.bf16.gmra.mrb[0].mxu0 %v414
    %v598 = vpop.f32.mrb[0].mxu0
    %v599 = vadd.f32 %v442, %v598
    %v600 = vpop.f32.mrb[0].mxu0
    %v601 = vpop.f32.mrb[0].mxu0
    %v602 = vadd.f32 %v442, %v601
    %v603 = vpop.f32.mrb[0].mxu0
    %604 = vmatprep.mubr.bf16.mxu0 0
    %605 = vmatmul.mubr.bf16.gmra.mrb[0].mxu0 %v415
    %v606 = vpop.f32.mrb[0].mxu0
    %v607 = vadd.f32 %v442, %v606
    %v608 = vpop.f32.mrb[0].mxu0
    %v609 = vpop.f32.mrb[0].mxu0
    %v610 = vadd.f32 %v442, %v609
    %v611 = vpop.f32.mrb[0].mxu0
    %612 = vmatprep.mubr.bf16.mxu0 0
    %613 = vmatmul.mubr.bf16.gmra.mrb[0].mxu0 %v416
    %v614 = vpop.f32.mrb[0].mxu0
    %v615 = vadd.f32 %v442, %v614
    %v616 = vpop.f32.mrb[0].mxu0
    %v617 = vpop.f32.mrb[0].mxu0
    %v618 = vadd.f32 %v442, %v617
    %v619 = vpop.f32.mrb[0].mxu0
    %620 = vmatprep.mubr.bf16.mxu0 0
    %621 = vmatmul.mubr.bf16.gmra.mrb[0].mxu0 %v417
    %v622 = vpop.f32.mrb[0].mxu0
    %v623 = vadd.f32 %v442, %v622
    %v624 = vpop.f32.mrb[0].mxu0
    %v625 = vpop.f32.mrb[0].mxu0
    %v626 = vadd.f32 %v442, %v625
    %v627 = vpop.f32.mrb[0].mxu0
    %628 = vmatprep.mubr.bf16.mxu0 0
    %629 = vmatmul.mubr.bf16.gmra.mrb[0].mxu0 %v418
    %v630 = vpop.f32.mrb[0].mxu0
    %v631 = vadd.f32 %v442, %v630
    %v632 = vpop.f32.mrb[0].mxu0
    %v633 = vpop.f32.mrb[0].mxu0
    %v634 = vadd.f32 %v442, %v633
    %v635 = vpop.f32.mrb[0].mxu0
    %636 = vmatprep.mubr.bf16.mxu0 0
    %637 = vmatmul.mubr.bf16.gmra.mrb[0].mxu0 %v419
    %v638 = vpop.f32.mrb[0].mxu0
    %v639 = vadd.f32 %v442, %v638
    %v640 = vpop.f32.mrb[0].mxu0
    %v641 = vpop.f32.mrb[0].mxu0
    %v642 = vadd.f32 %v442, %v641
    %v643 = vpop.f32.mrb[0].mxu0
    %644 = vmatprep.mubr.bf16.mxu0 0
    %645 = vmatmul.mubr.bf16.gmra.mrb[0].mxu0 %v420
    %v646 = vpop.f32.mrb[0].mxu0
    %v647 = vadd.f32 %v442, %v646
    %v648 = vpop.f32.mrb[0].mxu0
    %v649 = vpop.f32.mrb[0].mxu0
    %v650 = vadd.f32 %v442, %v649
    %v651 = vpop.f32.mrb[0].mxu0
    %652 = vdwg.mxu0
    %vm653 = vcmp.ge.f32.partialorder %v527, 0.0
    %vm654 = vcmp.ge.f32.partialorder %v530, 0.0
    %vm655 = vcmp.ge.f32.partialorder %v535, 0.0
    %vm656 = vcmp.ge.f32.partialorder %v538, 0.0
    %vm657 = vcmp.ge.f32.partialorder %v543, 0.0
    %vm658 = vcmp.ge.f32.partialorder %v546, 0.0
    %vm659 = vcmp.ge.f32.partialorder %v551, 0.0
    %vm660 = vcmp.ge.f32.partialorder %v554, 0.0
    %vm661 = vcmp.ge.f32.partialorder %v559, 0.0
    %vm662 = vcmp.ge.f32.partialorder %v562, 0.0
    %vm663 = vcmp.ge.f32.partialorder %v567, 0.0
    %vm664 = vcmp.ge.f32.partialorder %v570, 0.0
    %vm665 = vcmp.ge.f32.partialorder %v575, 0.0
    %vm666 = vcmp.ge.f32.partialorder %v578, 0.0
    %vm667 = vcmp.ge.f32.partialorder %v583, 0.0
    %vm668 = vcmp.ge.f32.partialorder %v586, 0.0
    %vm669 = vcmp.ge.f32.partialorder %v591, 0.0
    %vm670 = vcmp.ge.f32.partialorder %v594, 0.0
    %vm671 = vcmp.ge.f32.partialorder %v599, 0.0
    %vm672 = vcmp.ge.f32.partialorder %v602, 0.0
    %vm673 = vcmp.ge.f32.partialorder %v607, 0.0
    %vm674 = vcmp.ge.f32.partialorder %v610, 0.0
    %vm675 = vcmp.ge.f32.partialorder %v615, 0.0
    %vm676 = vcmp.ge.f32.partialorder %v618, 0.0
    %vm677 = vcmp.ge.f32.partialorder %v623, 0.0
    %vm678 = vcmp.ge.f32.partialorder %v626, 0.0
    %vm679 = vcmp.ge.f32.partialorder %v631, 0.0
    %vm680 = vcmp.ge.f32.partialorder %v634, 0.0
    %vm681 = vcmp.ge.f32.partialorder %v639, 0.0
    %vm682 = vcmp.ge.f32.partialorder %v642, 0.0
    %vm683 = vcmp.ge.f32.partialorder %v647, 0.0
    %vm684 = vcmp.ge.f32.partialorder %v650, 0.0
    %v685 = vmul.f32 %v527, 0.15
    %v686 = vmul.f32 %v530, 0.15
    %v687 = vmul.f32 %v535, 0.15
    %v688 = vmul.f32 %v538, 0.15
    %v689 = vmul.f32 %v543, 0.15
    %v690 = vmul.f32 %v546, 0.15
    %v691 = vmul.f32 %v551, 0.15
    %v692 = vmul.f32 %v554, 0.15
    %v693 = vmul.f32 %v559, 0.15
    %v694 = vmul.f32 %v562, 0.15
    %v695 = vmul.f32 %v567, 0.15
    %v696 = vmul.f32 %v570, 0.15
    %v697 = vmul.f32 %v575, 0.15
    %v698 = vmul.f32 %v578, 0.15
    %v699 = vmul.f32 %v583, 0.15
    %v700 = vmul.f32 %v586, 0.15
    %v701 = vmul.f32 %v591, 0.15
    %v702 = vmul.f32 %v594, 0.15
    %v703 = vmul.f32 %v599, 0.15
    %v704 = vmul.f32 %v602, 0.15
    %v705 = vmul.f32 %v607, 0.15
    %v706 = vmul.f32 %v610, 0.15
    %v707 = vmul.f32 %v615, 0.15
    %v708 = vmul.f32 %v618, 0.15
    %v709 = vmul.f32 %v623, 0.15
    %v710 = vmul.f32 %v626, 0.15
    %v711 = vmul.f32 %v631, 0.15
    %v712 = vmul.f32 %v634, 0.15
    %v713 = vmul.f32 %v639, 0.15
    %v714 = vmul.f32 %v642, 0.15
    %v715 = vmul.f32 %v647, 0.15
    %v716 = vmul.f32 %v650, 0.15
    %v717 = vsel %vm653, %v527, %v685
    %v718 = vsel %vm654, %v530, %v686
    %v719 = vsel %vm655, %v535, %v687
    %v720 = vsel %vm656, %v538, %v688
    %v721 = vsel %vm657, %v543, %v689
    %v722 = vsel %vm658, %v546, %v690
    %v723 = vsel %vm659, %v551, %v691
    %v724 = vsel %vm660, %v554, %v692
    %v725 = vsel %vm661, %v559, %v693
    %v726 = vsel %vm662, %v562, %v694
    %v727 = vsel %vm663, %v567, %v695
    %v728 = vsel %vm664, %v570, %v696
    %v729 = vsel %vm665, %v575, %v697
    %v730 = vsel %vm666, %v578, %v698
    %v731 = vsel %vm667, %v583, %v699
    %v732 = vsel %vm668, %v586, %v700
    %v733 = vsel %vm669, %v591, %v701
    %v734 = vsel %vm670, %v594, %v702
    %v735 = vsel %vm671, %v599, %v703
    %v736 = vsel %vm672, %v602, %v704
    %v737 = vsel %vm673, %v607, %v705
    %v738 = vsel %vm674, %v610, %v706
    %v739 = vsel %vm675, %v615, %v707
    %v740 = vsel %vm676, %v618, %v708
    %v741 = vsel %vm677, %v623, %v709
    %v742 = vsel %vm678, %v626, %v710
    %v743 = vsel %vm679, %v631, %v711
    %v744 = vsel %vm680, %v634, %v712
    %v745 = vsel %vm681, %v639, %v713
    %v746 = vsel %vm682, %v642, %v714
    %v747 = vsel %vm683, %v647, %v715
    %v748 = vsel %vm684, %v650, %v716
    %v749 = vpack.c.bf16 %v718, %v717
    %v750 = vpack.c.bf16 %v720, %v719
    %v751 = vpack.c.bf16 %v722, %v721
    %v752 = vpack.c.bf16 %v724, %v723
    %v753 = vpack.c.bf16 %v726, %v725
    %v754 = vpack.c.bf16 %v728, %v727
    %v755 = vpack.c.bf16 %v730, %v729
    %v756 = vpack.c.bf16 %v732, %v731
    %v757 = vpack.c.bf16 %v734, %v733
    %v758 = vpack.c.bf16 %v736, %v735
    %v759 = vpack.c.bf16 %v738, %v737
    %v760 = vpack.c.bf16 %v740, %v739
    %v761 = vpack.c.bf16 %v742, %v741
    %v762 = vpack.c.bf16 %v744, %v743
    %v763 = vpack.c.bf16 %v746, %v745
    %v764 = vpack.c.bf16 %v748, %v747
    %v765 = vld [vmem:[%s5] sm:$0xf]
    %v766 = vld [vmem:[%s5 + $0x4] sm:$0xf]
    %v767 = vld [vmem:[%s5 + $0x8] sm:$0xf]
    %v768 = vld [vmem:[%s5 + $0xc] sm:$0xf]
    %v769 = vld [vmem:[%s5 + $0x10] sm:$0xf]
    %v770 = vld [vmem:[%s5 + $0x14] sm:$0xf]
    %v771 = vld [vmem:[%s5 + $0x18] sm:$0xf]
    %v772 = vld [vmem:[%s5 + $0x1c] sm:$0xf]
    %v773 = vld [vmem:[%s5 + $0x20] sm:$0xf]
    %v774 = vld [vmem:[%s5 + $0x24] sm:$0xf]
    %v775 = vld [vmem:[%s5 + $0x28] sm:$0xf]
    %v776 = vld [vmem:[%s5 + $0x2c] sm:$0xf]
    %v777 = vld [vmem:[%s5 + $0x30] sm:$0xf]
    %v778 = vld [vmem:[%s5 + $0x34] sm:$0xf]
    %v779 = vld [vmem:[%s5 + $0x38] sm:$0xf]
    %v780 = vld [vmem:[%s5 + $0x3c] sm:$0xf]
    %v781 = vld [vmem:[%s6] sm:$0x1]
    %v783 = vlaneseq
    %v784 = vshrl.u32 %v783, 7
    %v785 = vsub.s32 0, %v784
    %v786 = vrot.slane %v781, %v785
    %v804 = vunpack.c.l.b16 %v765
    %v805 = vunpack.c.l.b16 %v766
    %v806 = vunpack.c.l.b16 %v767
    %v807 = vunpack.c.l.b16 %v768
    %v808 = vunpack.c.l.b16 %v769
    %v809 = vunpack.c.l.b16 %v770
    %v810 = vunpack.c.l.b16 %v771
    %v811 = vunpack.c.l.b16 %v772
    %v812 = vunpack.c.l.b16 %v773
    %v813 = vunpack.c.l.b16 %v774
    %v814 = vunpack.c.l.b16 %v775
    %v815 = vunpack.c.l.b16 %v776
    %v816 = vunpack.c.l.b16 %v777
    %v817 = vunpack.c.l.b16 %v778
    %v818 = vunpack.c.l.b16 %v779
    %v819 = vunpack.c.l.b16 %v780
    %v820 = vpack.c.b16 %v805, %v804
    %v821 = vpack.c.b16 %v807, %v806
    %v822 = vpack.c.b16 %v809, %v808
    %v823 = vpack.c.b16 %v811, %v810
    %v824 = vpack.c.b16 %v813, %v812
    %v825 = vpack.c.b16 %v815, %v814
    %v826 = vpack.c.b16 %v817, %v816
    %v827 = vpack.c.b16 %v819, %v818
    %836 = vmatprep.subr.bf16.mxu0 0
    %837 = vmatpush1.bf16.msra.mxu0 %v820
    %838 = vmatprep.subr.bf16.mxu0 0
    %839 = vmatpush1.bf16.msra.mxu0 %v821
    %840 = vmatprep.subr.bf16.mxu0 0
    %841 = vmatpush1.bf16.msra.mxu0 %v822
    %842 = vmatprep.subr.bf16.mxu0 0
    %843 = vmatpush1.bf16.msra.mxu0 %v823
    %844 = vmatprep.subr.bf16.mxu0 0
    %845 = vmatpush1.bf16.msra.mxu0 %v824
    %846 = vmatprep.subr.bf16.mxu0 0
    %847 = vmatpush1.bf16.msra.mxu0 %v825
    %848 = vmatprep.subr.bf16.mxu0 0
    %849 = vmatpush1.bf16.msra.mxu0 %v826
    %850 = vmatprep.subr.bf16.mxu0 0
    %851 = vmatpush1.bf16.msra.mxu0 %v827
    %852 = vmatprep.subr.bf16.mxu0 0
    %853 = vmatpush1.bf16.msra.mxu0 0
    %854 = vmatprep.subr.bf16.mxu0 0
    %855 = vmatpush1.bf16.msra.mxu0 0
    %856 = vmatprep.subr.bf16.mxu0 0
    %857 = vmatpush1.bf16.msra.mxu0 0
    %858 = vmatprep.subr.bf16.mxu0 0
    %859 = vmatpush1.bf16.msra.mxu0 0
    %860 = vmatprep.subr.bf16.mxu0 0
    %861 = vmatpush1.bf16.msra.mxu0 0
    %862 = vmatprep.subr.bf16.mxu0 0
    %863 = vmatpush1.bf16.msra.mxu0 0
    %864 = vmatprep.subr.bf16.mxu0 0
    %865 = vmatpush1.bf16.msra.mxu0 0
    %866 = vmatprep.subr.bf16.mxu0 0
    %867 = vmatpush1.bf16.msra.mxu0 0
    %868 = vmatprep.mubr.bf16.mxu0 0
    %869 = vmatmul.mubr.bf16.gmra.mrb[0].mxu0 %v749
    %v870 = vpop.f32.mrb[0].mxu0
    %v871 = vadd.f32 %v786, %v870
    %v872 = vpop.f32.mrb[0].mxu0
    %v873 = vpop.f32.mrb[0].mxu0
    %v874 = vadd.f32 %v786, %v873
    %v875 = vpop.f32.mrb[0].mxu0
    %876 = vmatprep.mubr.bf16.mxu0 0
    %877 = vmatmul.mubr.bf16.gmra.mrb[0].mxu0 %v750
    %v878 = vpop.f32.mrb[0].mxu0
    %v879 = vadd.f32 %v786, %v878
    %v880 = vpop.f32.mrb[0].mxu0
    %v881 = vpop.f32.mrb[0].mxu0
    %v882 = vadd.f32 %v786, %v881
    %v883 = vpop.f32.mrb[0].mxu0
    %884 = vmatprep.mubr.bf16.mxu0 0
    %885 = vmatmul.mubr.bf16.gmra.mrb[0].mxu0 %v751
    %v886 = vpop.f32.mrb[0].mxu0
    %v887 = vadd.f32 %v786, %v886
    %v888 = vpop.f32.mrb[0].mxu0
    %v889 = vpop.f32.mrb[0].mxu0
    %v890 = vadd.f32 %v786, %v889
    %v891 = vpop.f32.mrb[0].mxu0
    %892 = vmatprep.mubr.bf16.mxu0 0
    %893 = vmatmul.mubr.bf16.gmra.mrb[0].mxu0 %v752
    %v894 = vpop.f32.mrb[0].mxu0
    %v895 = vadd.f32 %v786, %v894
    %v896 = vpop.f32.mrb[0].mxu0
    %v897 = vpop.f32.mrb[0].mxu0
    %v898 = vadd.f32 %v786, %v897
    %v899 = vpop.f32.mrb[0].mxu0
    %900 = vmatprep.mubr.bf16.mxu0 0
    %901 = vmatmul.mubr.bf16.gmra.mrb[0].mxu0 %v753
    %v902 = vpop.f32.mrb[0].mxu0
    %v903 = vadd.f32 %v786, %v902
    %v904 = vpop.f32.mrb[0].mxu0
    %v905 = vpop.f32.mrb[0].mxu0
    %v906 = vadd.f32 %v786, %v905
    %v907 = vpop.f32.mrb[0].mxu0
    %908 = vmatprep.mubr.bf16.mxu0 0
    %909 = vmatmul.mubr.bf16.gmra.mrb[0].mxu0 %v754
    %v910 = vpop.f32.mrb[0].mxu0
    %v911 = vadd.f32 %v786, %v910
    %v912 = vpop.f32.mrb[0].mxu0
    %v913 = vpop.f32.mrb[0].mxu0
    %v914 = vadd.f32 %v786, %v913
    %v915 = vpop.f32.mrb[0].mxu0
    %916 = vmatprep.mubr.bf16.mxu0 0
    %917 = vmatmul.mubr.bf16.gmra.mrb[0].mxu0 %v755
    %v918 = vpop.f32.mrb[0].mxu0
    %v919 = vadd.f32 %v786, %v918
    %v920 = vpop.f32.mrb[0].mxu0
    %v921 = vpop.f32.mrb[0].mxu0
    %v922 = vadd.f32 %v786, %v921
    %v923 = vpop.f32.mrb[0].mxu0
    %924 = vmatprep.mubr.bf16.mxu0 0
    %925 = vmatmul.mubr.bf16.gmra.mrb[0].mxu0 %v756
    %v926 = vpop.f32.mrb[0].mxu0
    %v927 = vadd.f32 %v786, %v926
    %v928 = vpop.f32.mrb[0].mxu0
    %v929 = vpop.f32.mrb[0].mxu0
    %v930 = vadd.f32 %v786, %v929
    %v931 = vpop.f32.mrb[0].mxu0
    %932 = vmatprep.mubr.bf16.mxu0 0
    %933 = vmatmul.mubr.bf16.gmra.mrb[0].mxu0 %v757
    %v934 = vpop.f32.mrb[0].mxu0
    %v935 = vadd.f32 %v786, %v934
    %v936 = vpop.f32.mrb[0].mxu0
    %v937 = vpop.f32.mrb[0].mxu0
    %v938 = vadd.f32 %v786, %v937
    %v939 = vpop.f32.mrb[0].mxu0
    %940 = vmatprep.mubr.bf16.mxu0 0
    %941 = vmatmul.mubr.bf16.gmra.mrb[0].mxu0 %v758
    %v942 = vpop.f32.mrb[0].mxu0
    %v943 = vadd.f32 %v786, %v942
    %v944 = vpop.f32.mrb[0].mxu0
    %v945 = vpop.f32.mrb[0].mxu0
    %v946 = vadd.f32 %v786, %v945
    %v947 = vpop.f32.mrb[0].mxu0
    %948 = vmatprep.mubr.bf16.mxu0 0
    %949 = vmatmul.mubr.bf16.gmra.mrb[0].mxu0 %v759
    %v950 = vpop.f32.mrb[0].mxu0
    %v951 = vadd.f32 %v786, %v950
    %v952 = vpop.f32.mrb[0].mxu0
    %v953 = vpop.f32.mrb[0].mxu0
    %v954 = vadd.f32 %v786, %v953
    %v955 = vpop.f32.mrb[0].mxu0
    %956 = vmatprep.mubr.bf16.mxu0 0
    %957 = vmatmul.mubr.bf16.gmra.mrb[0].mxu0 %v760
    %v958 = vpop.f32.mrb[0].mxu0
    %v959 = vadd.f32 %v786, %v958
    %v960 = vpop.f32.mrb[0].mxu0
    %v961 = vpop.f32.mrb[0].mxu0
    %v962 = vadd.f32 %v786, %v961
    %v963 = vpop.f32.mrb[0].mxu0
    %964 = vmatprep.mubr.bf16.mxu0 0
    %965 = vmatmul.mubr.bf16.gmra.mrb[0].mxu0 %v761
    %v966 = vpop.f32.mrb[0].mxu0
    %v967 = vadd.f32 %v786, %v966
    %v968 = vpop.f32.mrb[0].mxu0
    %v969 = vpop.f32.mrb[0].mxu0
    %v970 = vadd.f32 %v786, %v969
    %v971 = vpop.f32.mrb[0].mxu0
    %972 = vmatprep.mubr.bf16.mxu0 0
    %973 = vmatmul.mubr.bf16.gmra.mrb[0].mxu0 %v762
    %v974 = vpop.f32.mrb[0].mxu0
    %v975 = vadd.f32 %v786, %v974
    %v976 = vpop.f32.mrb[0].mxu0
    %v977 = vpop.f32.mrb[0].mxu0
    %v978 = vadd.f32 %v786, %v977
    %v979 = vpop.f32.mrb[0].mxu0
    %980 = vmatprep.mubr.bf16.mxu0 0
    %981 = vmatmul.mubr.bf16.gmra.mrb[0].mxu0 %v763
    %v982 = vpop.f32.mrb[0].mxu0
    %v983 = vadd.f32 %v786, %v982
    %v984 = vpop.f32.mrb[0].mxu0
    %v985 = vpop.f32.mrb[0].mxu0
    %v986 = vadd.f32 %v786, %v985
    %v987 = vpop.f32.mrb[0].mxu0
    %988 = vmatprep.mubr.bf16.mxu0 0
    %989 = vmatmul.mubr.bf16.gmra.mrb[0].mxu0 %v764
    %v990 = vpop.f32.mrb[0].mxu0
    %v991 = vadd.f32 %v786, %v990
    %v992 = vpop.f32.mrb[0].mxu0
    %v993 = vpop.f32.mrb[0].mxu0
    %v994 = vadd.f32 %v786, %v993
    %v995 = vpop.f32.mrb[0].mxu0
    %996 = vdwg.mxu0
    %997 = vst [vmem:[#allocation2] sm:$0xff] %v871
    %998 = vst [vmem:[#allocation2 + $0x8] sm:$0xff] %v874
    %999 = vst [vmem:[#allocation2 + $0x10] sm:$0xff] %v879
    %1000 = vst [vmem:[#allocation2 + $0x18] sm:$0xff] %v882
    %1001 = vst [vmem:[#allocation2 + $0x20] sm:$0xff] %v887
    %1002 = vst [vmem:[#allocation2 + $0x28] sm:$0xff] %v890
    %1003 = vst [vmem:[#allocation2 + $0x30] sm:$0xff] %v895
    %1004 = vst [vmem:[#allocation2 + $0x38] sm:$0xff] %v898
    %1005 = vst [vmem:[#allocation2 + $0x40] sm:$0xff] %v903
    %1006 = vst [vmem:[#allocation2 + $0x48] sm:$0xff] %v906
    %1007 = vst [vmem:[#allocation2 + $0x50] sm:$0xff] %v911
    %1008 = vst [vmem:[#allocation2 + $0x58] sm:$0xff] %v914
    %1009 = vst [vmem:[#allocation2 + $0x60] sm:$0xff] %v919
    %1010 = vst [vmem:[#allocation2 + $0x68] sm:$0xff] %v922
    %1011 = vst [vmem:[#allocation2 + $0x70] sm:$0xff] %v927
    %1012 = vst [vmem:[#allocation2 + $0x78] sm:$0xff] %v930
    %1013 = vst [vmem:[#allocation2 + $0x80] sm:$0xff] %v935
    %1014 = vst [vmem:[#allocation2 + $0x88] sm:$0xff] %v938
    %1015 = vst [vmem:[#allocation2 + $0x90] sm:$0xff] %v943
    %1016 = vst [vmem:[#allocation2 + $0x98] sm:$0xff] %v946
    %1017 = vst [vmem:[#allocation2 + $0xa0] sm:$0xff] %v951
    %1018 = vst [vmem:[#allocation2 + $0xa8] sm:$0xff] %v954
    %1019 = vst [vmem:[#allocation2 + $0xb0] sm:$0xff] %v959
    %1020 = vst [vmem:[#allocation2 + $0xb8] sm:$0xff] %v962
    %1021 = vst [vmem:[#allocation2 + $0xc0] sm:$0xff] %v967
    %1022 = vst [vmem:[#allocation2 + $0xc8] sm:$0xff] %v970
    %1023 = vst [vmem:[#allocation2 + $0xd0] sm:$0xff] %v975
    %1024 = vst [vmem:[#allocation2 + $0xd8] sm:$0xff] %v978
    %1025 = vst [vmem:[#allocation2 + $0xe0] sm:$0xff] %v983
    %1026 = vst [vmem:[#allocation2 + $0xe8] sm:$0xff] %v986
    %1027 = vst [vmem:[#allocation2 + $0xf0] sm:$0xff] %v991
    %1028 = vst [vmem:[#allocation2 + $0xf8] sm:$0xff] %v994
    // Predicated region
    $region30: #{tpu_custom_call.1} parent=1 // pred_check
      _
    $region31: #{tpu_custom_call.1} parent=1 // pred_check_branch
      %1030 = sbr.rel (0) target = $region33
    $region32: #{tpu_custom_call.1} parent=1 // pred_region
      %s1032 = ssub.s32 4096, 4096
      %1033 = vsyncadd [#allocation3], %s1032
      %s1034 = sshll.u32 [#allocation2], 4
      %s1035 = int_to_ptr.vmem [resolvable:$true] %s1034
      %1040 = dma.vmem_to_hbm [thread:$0]  %s1035, 4096, %s7, [#allocation3], 128, 128, 8
    $region33: #{tpu_custom_call.1} parent=1 // pred_fallthru
      _
    // Predicated region
    $region34: #{tpu_custom_call.1} parent=1 // pred_check
      _
    $region35: #{tpu_custom_call.1} parent=1 // pred_check_branch
      %1042 = sbr.rel (0) target = $region37
    $region36: #{tpu_custom_call.1} parent=1 // pred_region
      %1043 = dma.done [#allocation3], 4096
    $region37: #{tpu_custom_call.1} parent=1 // pred_fallthru
      _
    %1044 = vsyncpa [#allocation3], 1

// kernel: tpu_custom_call.1
$region0: #{tpu_custom_call.1}
  #allocation0 [shape = 'u32[]', space=smem, size = 0x4, offset = 0x4, fixed_abs, tag = 'smem constant byte address 0x4 - core index']
  #allocation1 [shape = 'u32[144,128]{1,0:T(1,128)}', space=vmem, size = 0x12000, scoped, tag = 'internal scratch']
  %s0 = inlined_call_operand.vmem [shape: f32[256,32], index: 0, kind: input, shape index: {}]
  %s1 = inlined_call_operand.vmem [shape: bf16[32,128], index: 1, kind: input, shape index: {}]
  %s2 = inlined_call_operand.vmem [shape: f32[1,128], index: 2, kind: input, shape index: {}]
  %s3 = inlined_call_operand.vmem [shape: bf16[128,128], index: 3, kind: input, shape index: {}]
  %s4 = inlined_call_operand.vmem [shape: f32[1,128], index: 4, kind: input, shape index: {}]
  %s5 = inlined_call_operand.vmem [shape: bf16[128,128], index: 5, kind: input, shape index: {}]
  %s6 = inlined_call_operand.vmem [shape: f32[1,128], index: 6, kind: input, shape index: {}]
  %s7 = inlined_call_operand.hbm [shape: f32[256,128], index: 7, kind: output, shape index: {}]
  %s8 = sld [smem:[#allocation0]]
  $region38: #{tpu_custom_call.1} parent=0
    _
  %s10 = ssub.s32 1, %s8
  %s11 = scalar_select 0, %s10, %s8
  $region1: #{tpu_custom_call.1} parent=0
    #allocation2 [shape = 'u8[131072]{0}', space=vmem, size = 0x20000, scoped, tag = 'output window, operand 0, single buffered']
    #allocation3 [shape = 's32[1]{0}', space=sflag, size = 0x4, scoped, tag = 'scoped memory for tpu_custom_call.1']
    %12 = vsyncpa [#allocation3], 0
    // Predicated region
    $region2: #{tpu_custom_call.1} parent=1 // pred_check
      _
    $region3: #{tpu_custom_call.1} parent=1 // pred_check_branch
      %14 = sbr.rel (0) target = $region5
    $region4: #{tpu_custom_call.1} parent=1 // pred_region
      _
    $region5: #{tpu_custom_call.1} parent=1 // pred_fallthru
      _
    // Predicated region
    $region6: #{tpu_custom_call.1} parent=1 // pred_check
      _
    $region7: #{tpu_custom_call.1} parent=1 // pred_check_branch
      %16 = sbr.rel (0) target = $region9
    $region8: #{tpu_custom_call.1} parent=1 // pred_region
      _
    $region9: #{tpu_custom_call.1} parent=1 // pred_fallthru
      _
    // Predicated region
    $region10: #{tpu_custom_call.1} parent=1 // pred_check
      _
    $region11: #{tpu_custom_call.1} parent=1 // pred_check_branch
      %18 = sbr.rel (0) target = $region13
    $region12: #{tpu_custom_call.1} parent=1 // pred_region
      _
    $region13: #{tpu_custom_call.1} parent=1 // pred_fallthru
      _
    // Predicated region
    $region14: #{tpu_custom_call.1} parent=1 // pred_check
      _
    $region15: #{tpu_custom_call.1} parent=1 // pred_check_branch
      %20 = sbr.rel (0) target = $region17
    $region16: #{tpu_custom_call.1} parent=1 // pred_region
      _
    $region17: #{tpu_custom_call.1} parent=1 // pred_fallthru
      _
    // Predicated region
    $region18: #{tpu_custom_call.1} parent=1 // pred_check
      _
    $region19: #{tpu_custom_call.1} parent=1 // pred_check_branch
      %22 = sbr.rel (0) target = $region21
    $region20: #{tpu_custom_call.1} parent=1 // pred_region
      _
    $region21: #{tpu_custom_call.1} parent=1 // pred_fallthru
      _
    // Predicated region
    $region22: #{tpu_custom_call.1} parent=1 // pred_check
      _
    $region23: #{tpu_custom_call.1} parent=1 // pred_check_branch
      %24 = sbr.rel (0) target = $region25
    $region24: #{tpu_custom_call.1} parent=1 // pred_region
      _
    $region25: #{tpu_custom_call.1} parent=1 // pred_fallthru
      _
    // Predicated region
    $region26: #{tpu_custom_call.1} parent=1 // pred_check
      _
    $region27: #{tpu_custom_call.1} parent=1 // pred_check_branch
      %26 = sbr.rel (0) target = $region29
    $region28: #{tpu_custom_call.1} parent=1 // pred_region
      _
    $region29: #{tpu_custom_call.1} parent=1 // pred_fallthru
      _
    %v28 = vld [vmem:[%s0] sm:$0xff]
    %v29 = vld [vmem:[%s0 + $0x8] sm:$0xff]
    %v30 = vld [vmem:[%s0 + $0x10] sm:$0xff]
    %v31 = vld [vmem:[%s0 + $0x18] sm:$0xff]
    %v32 = vld [vmem:[%s0 + $0x20] sm:$0xff]
    %v33 = vld [vmem:[%s0 + $0x28] sm:$0xff]
    %v34 = vld [vmem:[%s0 + $0x30] sm:$0xff]
    %v35 = vld [vmem:[%s0 + $0x38] sm:$0xff]
    %v36 = vld [vmem:[%s0 + $0x40] sm:$0xff]
    %v37 = vld [vmem:[%s0 + $0x48] sm:$0xff]
    %v38 = vld [vmem:[%s0 + $0x50] sm:$0xff]
    %v39 = vld [vmem:[%s0 + $0x58] sm:$0xff]
    %v40 = vld [vmem:[%s0 + $0x60] sm:$0xff]
    %v41 = vld [vmem:[%s0 + $0x68] sm:$0xff]
    %v42 = vld [vmem:[%s0 + $0x70] sm:$0xff]
    %v43 = vld [vmem:[%s0 + $0x78] sm:$0xff]
    %v44 = vld [vmem:[%s0 + $0x80] sm:$0xff]
    %v45 = vld [vmem:[%s0 + $0x88] sm:$0xff]
    %v46 = vld [vmem:[%s0 + $0x90] sm:$0xff]
    %v47 = vld [vmem:[%s0 + $0x98] sm:$0xff]
    %v48 = vld [vmem:[%s0 + $0xa0] sm:$0xff]
    %v49 = vld [vmem:[%s0 + $0xa8] sm:$0xff]
    %v50 = vld [vmem:[%s0 + $0xb0] sm:$0xff]
    %v51 = vld [vmem:[%s0 + $0xb8] sm:$0xff]
    %v52 = vld [vmem:[%s0 + $0xc0] sm:$0xff]
    %v53 = vld [vmem:[%s0 + $0xc8] sm:$0xff]
    %v54 = vld [vmem:[%s0 + $0xd0] sm:$0xff]
    %v55 = vld [vmem:[%s0 + $0xd8] sm:$0xff]
    %v56 = vld [vmem:[%s0 + $0xe0] sm:$0xff]
    %v57 = vld [vmem:[%s0 + $0xe8] sm:$0xff]
    %v58 = vld [vmem:[%s0 + $0xf0] sm:$0xff]
    %v59 = vld [vmem:[%s0 + $0xf8] sm:$0xff]
    %v60 = vpack.c.bf16 %v29, %v28
    %v61 = vpack.c.bf16 %v31, %v30
    %v62 = vpack.c.bf16 %v33, %v32
    %v63 = vpack.c.bf16 %v35, %v34
    %v64 = vpack.c.bf16 %v37, %v36
    %v65 = vpack.c.bf16 %v39, %v38
    %v66 = vpack.c.bf16 %v41, %v40
    %v67 = vpack.c.bf16 %v43, %v42
    %v68 = vpack.c.bf16 %v45, %v44
    %v69 = vpack.c.bf16 %v47, %v46
    %v70 = vpack.c.bf16 %v49, %v48
    %v71 = vpack.c.bf16 %v51, %v50
    %v72 = vpack.c.bf16 %v53, %v52
    %v73 = vpack.c.bf16 %v55, %v54
    %v74 = vpack.c.bf16 %v57, %v56
    %v75 = vpack.c.bf16 %v59, %v58
    %v76 = vld [vmem:[%s1] sm:$0xf]
    %v77 = vld [vmem:[%s1 + $0x4] sm:$0xf]
    %v78 = vld [vmem:[%s1 + $0x8] sm:$0xf]
    %v79 = vld [vmem:[%s1 + $0xc] sm:$0xf]
    %v80 = vld [vmem:[%s2] sm:$0x1]
    %v82 = vlaneseq
    %v83 = vshrl.u32 %v82, 7
    %v84 = vsub.s32 0, %v83
    %v85 = vrot.slane %v80, %v84
    %v91 = vunpack.c.l.b16 %v76
    %v92 = vunpack.c.l.b16 %v77
    %v93 = vunpack.c.l.b16 %v78
    %v94 = vunpack.c.l.b16 %v79
    %v95 = vpack.c.b16 %v92, %v91
    %v96 = vpack.c.b16 %v94, %v93
    %vm99 = vcmask 261120
    %v101 = vsel %vm99, %v60, 0
    %v104 = vsel %vm99, %v61, 0
    %v107 = vsel %vm99, %v62, 0
    %v110 = vsel %vm99, %v63, 0
    %v113 = vsel %vm99, %v64, 0
    %v116 = vsel %vm99, %v65, 0
    %v119 = vsel %vm99, %v66, 0
    %v122 = vsel %vm99, %v67, 0
    %v125 = vsel %vm99, %v68, 0
    %v128 = vsel %vm99, %v69, 0
    %v131 = vsel %vm99, %v70, 0
    %v134 = vsel %vm99, %v71, 0
    %v137 = vsel %vm99, %v72, 0
    %v140 = vsel %vm99, %v73, 0
    %v143 = vsel %vm99, %v74, 0
    %v146 = vsel %vm99, %v75, 0
    %148 = vmatprep.subr.bf16.mxu0 0
    %149 = vmatpush1.bf16.msra.mxu0 %v95
    %150 = vmatprep.subr.bf16.mxu0 0
    %151 = vmatpush1.bf16.msra.mxu0 %v96
    %152 = vmatprep.subr.bf16.mxu0 0
    %153 = vmatpush1.bf16.msra.mxu0 0
    %154 = vmatprep.subr.bf16.mxu0 0
    %155 = vmatpush1.bf16.msra.mxu0 0
    %156 = vmatprep.subr.bf16.mxu0 0
    %157 = vmatpush1.bf16.msra.mxu0 0
    %158 = vmatprep.subr.bf16.mxu0 0
    %159 = vmatpush1.bf16.msra.mxu0 0
    %160 = vmatprep.subr.bf16.mxu0 0
    %161 = vmatpush1.bf16.msra.mxu0 0
    %162 = vmatprep.subr.bf16.mxu0 0
    %163 = vmatpush1.bf16.msra.mxu0 0
    %164 = vmatprep.subr.bf16.mxu0 0
    %165 = vmatpush1.bf16.msra.mxu0 0
    %166 = vmatprep.subr.bf16.mxu0 0
    %167 = vmatpush1.bf16.msra.mxu0 0
    %168 = vmatprep.subr.bf16.mxu0 0
    %169 = vmatpush1.bf16.msra.mxu0 0
    %170 = vmatprep.subr.bf16.mxu0 0
    %171 = vmatpush1.bf16.msra.mxu0 0
    %172 = vmatprep.subr.bf16.mxu0 0
    %173 = vmatpush1.bf16.msra.mxu0 0
    %174 = vmatprep.subr.bf16.mxu0 0
    %175 = vmatpush1.bf16.msra.mxu0 0
    %176 = vmatprep.subr.bf16.mxu0 0
    %177 = vmatpush1.bf16.msra.mxu0 0
    %178 = vmatprep.subr.bf16.mxu0 0
    %179 = vmatpush1.bf16.msra.mxu0 0
    %180 = vmatprep.mubr.bf16.mxu0 0
    %181 = vmatmul.mubr.bf16.gmra.mrb[0].mxu0 %v101
    %v182 = vpop.f32.mrb[0].mxu0
    %v183 = vadd.f32 %v85, %v182
    %v184 = vpop.f32.mrb[0].mxu0
    %v185 = vpop.f32.mrb[0].mxu0
    %v186 = vadd.f32 %v85, %v185
    %v187 = vpop.f32.mrb[0].mxu0
    %188 = vmatprep.mubr.bf16.mxu0 0
    %189 = vmatmul.mubr.bf16.gmra.mrb[0].mxu0 %v104
    %v190 = vpop.f32.mrb[0].mxu0
    %v191 = vadd.f32 %v85, %v190
    %v192 = vpop.f32.mrb[0].mxu0
    %v193 = vpop.f32.mrb[0].mxu0
    %v194 = vadd.f32 %v85, %v193
    %v195 = vpop.f32.mrb[0].mxu0
    %196 = vmatprep.mubr.bf16.mxu0 0
    %197 = vmatmul.mubr.bf16.gmra.mrb[0].mxu0 %v107
    %v198 = vpop.f32.mrb[0].mxu0
    %v199 = vadd.f32 %v85, %v198
    %v200 = vpop.f32.mrb[0].mxu0
    %v201 = vpop.f32.mrb[0].mxu0
    %v202 = vadd.f32 %v85, %v201
    %v203 = vpop.f32.mrb[0].mxu0
    %204 = vmatprep.mubr.bf16.mxu0 0
    %205 = vmatmul.mubr.bf16.gmra.mrb[0].mxu0 %v110
    %v206 = vpop.f32.mrb[0].mxu0
    %v207 = vadd.f32 %v85, %v206
    %v208 = vpop.f32.mrb[0].mxu0
    %v209 = vpop.f32.mrb[0].mxu0
    %v210 = vadd.f32 %v85, %v209
    %v211 = vpop.f32.mrb[0].mxu0
    %212 = vmatprep.mubr.bf16.mxu0 0
    %213 = vmatmul.mubr.bf16.gmra.mrb[0].mxu0 %v113
    %v214 = vpop.f32.mrb[0].mxu0
    %v215 = vadd.f32 %v85, %v214
    %v216 = vpop.f32.mrb[0].mxu0
    %v217 = vpop.f32.mrb[0].mxu0
    %v218 = vadd.f32 %v85, %v217
    %v219 = vpop.f32.mrb[0].mxu0
    %220 = vmatprep.mubr.bf16.mxu0 0
    %221 = vmatmul.mubr.bf16.gmra.mrb[0].mxu0 %v116
    %v222 = vpop.f32.mrb[0].mxu0
    %v223 = vadd.f32 %v85, %v222
    %v224 = vpop.f32.mrb[0].mxu0
    %v225 = vpop.f32.mrb[0].mxu0
    %v226 = vadd.f32 %v85, %v225
    %v227 = vpop.f32.mrb[0].mxu0
    %228 = vmatprep.mubr.bf16.mxu0 0
    %229 = vmatmul.mubr.bf16.gmra.mrb[0].mxu0 %v119
    %v230 = vpop.f32.mrb[0].mxu0
    %v231 = vadd.f32 %v85, %v230
    %v232 = vpop.f32.mrb[0].mxu0
    %v233 = vpop.f32.mrb[0].mxu0
    %v234 = vadd.f32 %v85, %v233
    %v235 = vpop.f32.mrb[0].mxu0
    %236 = vmatprep.mubr.bf16.mxu0 0
    %237 = vmatmul.mubr.bf16.gmra.mrb[0].mxu0 %v122
    %v238 = vpop.f32.mrb[0].mxu0
    %v239 = vadd.f32 %v85, %v238
    %v240 = vpop.f32.mrb[0].mxu0
    %v241 = vpop.f32.mrb[0].mxu0
    %v242 = vadd.f32 %v85, %v241
    %v243 = vpop.f32.mrb[0].mxu0
    %244 = vmatprep.mubr.bf16.mxu0 0
    %245 = vmatmul.mubr.bf16.gmra.mrb[0].mxu0 %v125
    %v246 = vpop.f32.mrb[0].mxu0
    %v247 = vadd.f32 %v85, %v246
    %v248 = vpop.f32.mrb[0].mxu0
    %v249 = vpop.f32.mrb[0].mxu0
    %v250 = vadd.f32 %v85, %v249
    %v251 = vpop.f32.mrb[0].mxu0
    %252 = vmatprep.mubr.bf16.mxu0 0
    %253 = vmatmul.mubr.bf16.gmra.mrb[0].mxu0 %v128
    %v254 = vpop.f32.mrb[0].mxu0
    %v255 = vadd.f32 %v85, %v254
    %v256 = vpop.f32.mrb[0].mxu0
    %v257 = vpop.f32.mrb[0].mxu0
    %v258 = vadd.f32 %v85, %v257
    %v259 = vpop.f32.mrb[0].mxu0
    %260 = vmatprep.mubr.bf16.mxu0 0
    %261 = vmatmul.mubr.bf16.gmra.mrb[0].mxu0 %v131
    %v262 = vpop.f32.mrb[0].mxu0
    %v263 = vadd.f32 %v85, %v262
    %v264 = vpop.f32.mrb[0].mxu0
    %v265 = vpop.f32.mrb[0].mxu0
    %v266 = vadd.f32 %v85, %v265
    %v267 = vpop.f32.mrb[0].mxu0
    %268 = vmatprep.mubr.bf16.mxu0 0
    %269 = vmatmul.mubr.bf16.gmra.mrb[0].mxu0 %v134
    %v270 = vpop.f32.mrb[0].mxu0
    %v271 = vadd.f32 %v85, %v270
    %v272 = vpop.f32.mrb[0].mxu0
    %v273 = vpop.f32.mrb[0].mxu0
    %v274 = vadd.f32 %v85, %v273
    %v275 = vpop.f32.mrb[0].mxu0
    %276 = vmatprep.mubr.bf16.mxu0 0
    %277 = vmatmul.mubr.bf16.gmra.mrb[0].mxu0 %v137
    %v278 = vpop.f32.mrb[0].mxu0
    %v279 = vadd.f32 %v85, %v278
    %v280 = vpop.f32.mrb[0].mxu0
    %v281 = vpop.f32.mrb[0].mxu0
    %v282 = vadd.f32 %v85, %v281
    %v283 = vpop.f32.mrb[0].mxu0
    %284 = vmatprep.mubr.bf16.mxu0 0
    %285 = vmatmul.mubr.bf16.gmra.mrb[0].mxu0 %v140
    %v286 = vpop.f32.mrb[0].mxu0
    %v287 = vadd.f32 %v85, %v286
    %v288 = vpop.f32.mrb[0].mxu0
    %v289 = vpop.f32.mrb[0].mxu0
    %v290 = vadd.f32 %v85, %v289
    %v291 = vpop.f32.mrb[0].mxu0
    %292 = vmatprep.mubr.bf16.mxu0 0
    %293 = vmatmul.mubr.bf16.gmra.mrb[0].mxu0 %v143
    %v294 = vpop.f32.mrb[0].mxu0
    %v295 = vadd.f32 %v85, %v294
    %v296 = vpop.f32.mrb[0].mxu0
    %v297 = vpop.f32.mrb[0].mxu0
    %v298 = vadd.f32 %v85, %v297
    %v299 = vpop.f32.mrb[0].mxu0
    %300 = vmatprep.mubr.bf16.mxu0 0
    %301 = vmatmul.mubr.bf16.gmra.mrb[0].mxu0 %v146
    %v302 = vpop.f32.mrb[0].mxu0
    %v303 = vadd.f32 %v85, %v302
    %v304 = vpop.f32.mrb[0].mxu0
    %v305 = vpop.f32.mrb[0].mxu0
    %v306 = vadd.f32 %v85, %v305
    %v307 = vpop.f32.mrb[0].mxu0
    %308 = vdwg.mxu0
    %vm309 = vcmp.ge.f32.partialorder %v183, 0.0
    %vm310 = vcmp.ge.f32.partialorder %v186, 0.0
    %vm311 = vcmp.ge.f32.partialorder %v191, 0.0
    %vm312 = vcmp.ge.f32.partialorder %v194, 0.0
    %vm313 = vcmp.ge.f32.partialorder %v199, 0.0
    %vm314 = vcmp.ge.f32.partialorder %v202, 0.0
    %vm315 = vcmp.ge.f32.partialorder %v207, 0.0
    %vm316 = vcmp.ge.f32.partialorder %v210, 0.0
    %vm317 = vcmp.ge.f32.partialorder %v215, 0.0
    %vm318 = vcmp.ge.f32.partialorder %v218, 0.0
    %vm319 = vcmp.ge.f32.partialorder %v223, 0.0
    %vm320 = vcmp.ge.f32.partialorder %v226, 0.0
    %vm321 = vcmp.ge.f32.partialorder %v231, 0.0
    %vm322 = vcmp.ge.f32.partialorder %v234, 0.0
    %vm323 = vcmp.ge.f32.partialorder %v239, 0.0
    %vm324 = vcmp.ge.f32.partialorder %v242, 0.0
    %vm325 = vcmp.ge.f32.partialorder %v247, 0.0
    %vm326 = vcmp.ge.f32.partialorder %v250, 0.0
    %vm327 = vcmp.ge.f32.partialorder %v255, 0.0
    %vm328 = vcmp.ge.f32.partialorder %v258, 0.0
    %vm329 = vcmp.ge.f32.partialorder %v263, 0.0
    %vm330 = vcmp.ge.f32.partialorder %v266, 0.0
    %vm331 = vcmp.ge.f32.partialorder %v271, 0.0
    %vm332 = vcmp.ge.f32.partialorder %v274, 0.0
    %vm333 = vcmp.ge.f32.partialorder %v279, 0.0
    %vm334 = vcmp.ge.f32.partialorder %v282, 0.0
    %vm335 = vcmp.ge.f32.partialorder %v287, 0.0
    %vm336 = vcmp.ge.f32.partialorder %v290, 0.0
    %vm337 = vcmp.ge.f32.partialorder %v295, 0.0
    %vm338 = vcmp.ge.f32.partialorder %v298, 0.0
    %vm339 = vcmp.ge.f32.partialorder %v303, 0.0
    %vm340 = vcmp.ge.f32.partialorder %v306, 0.0
    %v341 = vmul.f32 %v183, 0.15
    %v342 = vmul.f32 %v186, 0.15
    %v343 = vmul.f32 %v191, 0.15
    %v344 = vmul.f32 %v194, 0.15
    %v345 = vmul.f32 %v199, 0.15
    %v346 = vmul.f32 %v202, 0.15
    %v347 = vmul.f32 %v207, 0.15
    %v348 = vmul.f32 %v210, 0.15
    %v349 = vmul.f32 %v215, 0.15
    %v350 = vmul.f32 %v218, 0.15
    %v351 = vmul.f32 %v223, 0.15
    %v352 = vmul.f32 %v226, 0.15
    %v353 = vmul.f32 %v231, 0.15
    %v354 = vmul.f32 %v234, 0.15
    %v355 = vmul.f32 %v239, 0.15
    %v356 = vmul.f32 %v242, 0.15
    %v357 = vmul.f32 %v247, 0.15
    %v358 = vmul.f32 %v250, 0.15
    %v359 = vmul.f32 %v255, 0.15
    %v360 = vmul.f32 %v258, 0.15
    %v361 = vmul.f32 %v263, 0.15
    %v362 = vmul.f32 %v266, 0.15
    %v363 = vmul.f32 %v271, 0.15
    %v364 = vmul.f32 %v274, 0.15
    %v365 = vmul.f32 %v279, 0.15
    %v366 = vmul.f32 %v282, 0.15
    %v367 = vmul.f32 %v287, 0.15
    %v368 = vmul.f32 %v290, 0.15
    %v369 = vmul.f32 %v295, 0.15
    %v370 = vmul.f32 %v298, 0.15
    %v371 = vmul.f32 %v303, 0.15
    %v372 = vmul.f32 %v306, 0.15
    %v373 = vsel %vm309, %v183, %v341
    %v374 = vsel %vm310, %v186, %v342
    %v375 = vsel %vm311, %v191, %v343
    %v376 = vsel %vm312, %v194, %v344
    %v377 = vsel %vm313, %v199, %v345
    %v378 = vsel %vm314, %v202, %v346
    %v379 = vsel %vm315, %v207, %v347
    %v380 = vsel %vm316, %v210, %v348
    %v381 = vsel %vm317, %v215, %v349
    %v382 = vsel %vm318, %v218, %v350
    %v383 = vsel %vm319, %v223, %v351
    %v384 = vsel %vm320, %v226, %v352
    %v385 = vsel %vm321, %v231, %v353
    %v386 = vsel %vm322, %v234, %v354
    %v387 = vsel %vm323, %v239, %v355
    %v388 = vsel %vm324, %v242, %v356
    %v389 = vsel %vm325, %v247, %v357
    %v390 = vsel %vm326, %v250, %v358
    %v391 = vsel %vm327, %v255, %v359
    %v392 = vsel %vm328, %v258, %v360
    %v393 = vsel %vm329, %v263, %v361
    %v394 = vsel %vm330, %v266, %v362
    %v395 = vsel %vm331, %v271, %v363
    %v396 = vsel %vm332, %v274, %v364
    %v397 = vsel %vm333, %v279, %v365
    %v398 = vsel %vm334, %v282, %v366
    %v399 = vsel %vm335, %v287, %v367
    %v400 = vsel %vm336, %v290, %v368
    %v401 = vsel %vm337, %v295, %v369
    %v402 = vsel %vm338, %v298, %v370
    %v403 = vsel %vm339, %v303, %v371
    %v404 = vsel %vm340, %v306, %v372
    %v405 = vpack.c.bf16 %v374, %v373
    %v406 = vpack.c.bf16 %v376, %v375
    %v407 = vpack.c.bf16 %v378, %v377
    %v408 = vpack.c.bf16 %v380, %v379
    %v409 = vpack.c.bf16 %v382, %v381
    %v410 = vpack.c.bf16 %v384, %v383
    %v411 = vpack.c.bf16 %v386, %v385
    %v412 = vpack.c.bf16 %v388, %v387
    %v413 = vpack.c.bf16 %v390, %v389
    %v414 = vpack.c.bf16 %v392, %v391
    %v415 = vpack.c.bf16 %v394, %v393
    %v416 = vpack.c.bf16 %v396, %v395
    %v417 = vpack.c.bf16 %v398, %v397
    %v418 = vpack.c.bf16 %v400, %v399
    %v419 = vpack.c.bf16 %v402, %v401
    %v420 = vpack.c.bf16 %v404, %v403
    %v421 = vld [vmem:[%s3] sm:$0xf]
    %v422 = vld [vmem:[%s3 + $0x4] sm:$0xf]
    %v423 = vld [vmem:[%s3 + $0x8] sm:$0xf]
    %v424 = vld [vmem:[%s3 + $0xc] sm:$0xf]
    %v425 = vld [vmem:[%s3 + $0x10] sm:$0xf]
    %v426 = vld [vmem:[%s3 + $0x14] sm:$0xf]
    %v427 = vld [vmem:[%s3 + $0x18] sm:$0xf]
    %v428 = vld [vmem:[%s3 + $0x1c] sm:$0xf]
    %v429 = vld [vmem:[%s3 + $0x20] sm:$0xf]
    %v430 = vld [vmem:[%s3 + $0x24] sm:$0xf]
    %v431 = vld [vmem:[%s3 + $0x28] sm:$0xf]
    %v432 = vld [vmem:[%s3 + $0x2c] sm:$0xf]
    %v433 = vld [vmem:[%s3 + $0x30] sm:$0xf]
    %v434 = vld [vmem:[%s3 + $0x34] sm:$0xf]
    %v435 = vld [vmem:[%s3 + $0x38] sm:$0xf]
    %v436 = vld [vmem:[%s3 + $0x3c] sm:$0xf]
    %v437 = vld [vmem:[%s4] sm:$0x1]
    %v439 = vlaneseq
    %v440 = vshrl.u32 %v439, 7
    %v441 = vsub.s32 0, %v440
    %v442 = vrot.slane %v437, %v441
    %v460 = vunpack.c.l.b16 %v421
    %v461 = vunpack.c.l.b16 %v422
    %v462 = vunpack.c.l.b16 %v423
    %v463 = vunpack.c.l.b16 %v424
    %v464 = vunpack.c.l.b16 %v425
    %v465 = vunpack.c.l.b16 %v426
    %v466 = vunpack.c.l.b16 %v427
    %v467 = vunpack.c.l.b16 %v428
    %v468 = vunpack.c.l.b16 %v429
    %v469 = vunpack.c.l.b16 %v430
    %v470 = vunpack.c.l.b16 %v431
    %v471 = vunpack.c.l.b16 %v432
    %v472 = vunpack.c.l.b16 %v433
    %v473 = vunpack.c.l.b16 %v434
    %v474 = vunpack.c.l.b16 %v435
    %v475 = vunpack.c.l.b16 %v436
    %v476 = vpack.c.b16 %v461, %v460
    %v477 = vpack.c.b16 %v463, %v462
    %v478 = vpack.c.b16 %v465, %v464
    %v479 = vpack.c.b16 %v467, %v466
    %v480 = vpack.c.b16 %v469, %v468
    %v481 = vpack.c.b16 %v471, %v470
    %v482 = vpack.c.b16 %v473, %v472
    %v483 = vpack.c.b16 %v475, %v474
    %492 = vmatprep.subr.bf16.mxu0 0
    %493 = vmatpush1.bf16.msra.mxu0 %v476
    %494 = vmatprep.subr.bf16.mxu0 0
    %495 = vmatpush1.bf16.msra.mxu0 %v477
    %496 = vmatprep.subr.bf16.mxu0 0
    %497 = vmatpush1.bf16.msra.mxu0 %v478
    %498 = vmatprep.subr.bf16.mxu0 0
    %499 = vmatpush1.bf16.msra.mxu0 %v479
    %500 = vmatprep.subr.bf16.mxu0 0
    %501 = vmatpush1.bf16.msra.mxu0 %v480
    %502 = vmatprep.subr.bf16.mxu0 0
    %503 = vmatpush1.bf16.msra.mxu0 %v481
    %504 = vmatprep.subr.bf16.mxu0 0
    %505 = vmatpush1.bf16.msra.mxu0 %v482
    %506 = vmatprep.subr.bf16.mxu0 0
    %507 = vmatpush1.bf16.msra.mxu0 %v483
    %508 = vmatprep.subr.bf16.mxu0 0
    %509 = vmatpush1.bf16.msra.mxu0 0
    %510 = vmatprep.subr.bf16.mxu0 0
    %511 = vmatpush1.bf16.msra.mxu0 0
    %512 = vmatprep.subr.bf16.mxu0 0
    %513 = vmatpush1.bf16.msra.mxu0 0
    %514 = vmatprep.subr.bf16.mxu0 0
    %515 = vmatpush1.bf16.msra.mxu0 0
    %516 = vmatprep.subr.bf16.mxu0 0
    %517 = vmatpush1.bf16.msra.mxu0 0
    %518 = vmatprep.subr.bf16.mxu0 0
    %519 = vmatpush1.bf16.msra.mxu0 0
    %520 = vmatprep.subr.bf16.mxu0 0
    %521 = vmatpush1.bf16.msra.mxu0 0
    %522 = vmatprep.subr.bf16.mxu0 0
    %523 = vmatpush1.bf16.msra.mxu0 0
    %524 = vmatprep.mubr.bf16.mxu0 0
    %525 = vmatmul.mubr.bf16.gmra.mrb[0].mxu0 %v405
    %v526 = vpop.f32.mrb[0].mxu0
    %v527 = vadd.f32 %v442, %v526
    %v528 = vpop.f32.mrb[0].mxu0
    %v529 = vpop.f32.mrb[0].mxu0
    %v530 = vadd.f32 %v442, %v529
    %v531 = vpop.f32.mrb[0].mxu0
    %532 = vmatprep.mubr.bf16.mxu0 0
    %533 = vmatmul.mubr.bf16.gmra.mrb[0].mxu0 %v406
    %v534 = vpop.f32.mrb[0].mxu0
    %v535 = vadd.f32 %v442, %v534
    %v536 = vpop.f32.mrb[0].mxu0
    %v537 = vpop.f32.mrb[0].mxu0
    %v538 = vadd.f32 %v442, %v537
    %v539 = vpop.f32.mrb[0].mxu0
    %540 = vmatprep.mubr.bf16.mxu0 0
    %541 = vmatmul.mubr.bf16.gmra.mrb[0].mxu0 %v407
    %v542 = vpop.f32.mrb[0].mxu0
    %v543 = vadd.f32 %v442, %v542
    %v544 = vpop.f32.mrb[0].mxu0
    %v545 = vpop.f32.mrb[0].mxu0
    %v546 = vadd.f32 %v442, %v545
    %v547 = vpop.f32.mrb[0].mxu0
    %548 = vmatprep.mubr.bf16.mxu0 0
    %549 = vmatmul.mubr.bf16.gmra.mrb[0].mxu0 %v408
    %v550 = vpop.f32.mrb[0].mxu0
    %v551 = vadd.f32 %v442, %v550
    %v552 = vpop.f32.mrb[0].mxu0
    %v553 = vpop.f32.mrb[0].mxu0
    %v554 = vadd.f32 %v442, %v553
    %v555 = vpop.f32.mrb[0].mxu0
    %556 = vmatprep.mubr.bf16.mxu0 0
    %557 = vmatmul.mubr.bf16.gmra.mrb[0].mxu0 %v409
    %v558 = vpop.f32.mrb[0].mxu0
    %v559 = vadd.f32 %v442, %v558
    %v560 = vpop.f32.mrb[0].mxu0
    %v561 = vpop.f32.mrb[0].mxu0
    %v562 = vadd.f32 %v442, %v561
    %v563 = vpop.f32.mrb[0].mxu0
    %564 = vmatprep.mubr.bf16.mxu0 0
    %565 = vmatmul.mubr.bf16.gmra.mrb[0].mxu0 %v410
    %v566 = vpop.f32.mrb[0].mxu0
    %v567 = vadd.f32 %v442, %v566
    %v568 = vpop.f32.mrb[0].mxu0
    %v569 = vpop.f32.mrb[0].mxu0
    %v570 = vadd.f32 %v442, %v569
    %v571 = vpop.f32.mrb[0].mxu0
    %572 = vmatprep.mubr.bf16.mxu0 0
    %573 = vmatmul.mubr.bf16.gmra.mrb[0].mxu0 %v411
    %v574 = vpop.f32.mrb[0].mxu0
    %v575 = vadd.f32 %v442, %v574
    %v576 = vpop.f32.mrb[0].mxu0
    %v577 = vpop.f32.mrb[0].mxu0
    %v578 = vadd.f32 %v442, %v577
    %v579 = vpop.f32.mrb[0].mxu0
    %580 = vmatprep.mubr.bf16.mxu0 0
    %581 = vmatmul.mubr.bf16.gmra.mrb[0].mxu0 %v412
    %v582 = vpop.f32.mrb[0].mxu0
    %v583 = vadd.f32 %v442, %v582
    %v584 = vpop.f32.mrb[0].mxu0
    %v585 = vpop.f32.mrb[0].mxu0
    %v586 = vadd.f32 %v442, %v585
    %v587 = vpop.f32.mrb[0].mxu0
    %588 = vmatprep.mubr.bf16.mxu0 0
    %589 = vmatmul.mubr.bf16.gmra.mrb[0].mxu0 %v413
    %v590 = vpop.f32.mrb[0].mxu0
    %v591 = vadd.f32 %v442, %v590
    %v592 = vpop.f32.mrb[0].mxu0
    %v593 = vpop.f32.mrb[0].mxu0
    %v594 = vadd.f32 %v442, %v593
    %v595 = vpop.f32.mrb[0].mxu0
    %596 = vmatprep.mubr.bf16.mxu0 0
    %597 = vmatmul.mubr.bf16.gmra.mrb[0].mxu0 %v414
    %v598 = vpop.f32.mrb[0].mxu0
    %v599 = vadd.f32 %v442, %v598
    %v600 = vpop.f32.mrb[0].mxu0
    %v601 = vpop.f32.mrb[0].mxu0
    %v602 = vadd.f32 %v442, %v601
    %v603 = vpop.f32.mrb[0].mxu0
    %604 = vmatprep.mubr.bf16.mxu0 0
    %605 = vmatmul.mubr.bf16.gmra.mrb[0].mxu0 %v415
    %v606 = vpop.f32.mrb[0].mxu0
    %v607 = vadd.f32 %v442, %v606
    %v608 = vpop.f32.mrb[0].mxu0
    %v609 = vpop.f32.mrb[0].mxu0
    %v610 = vadd.f32 %v442, %v609
    %v611 = vpop.f32.mrb[0].mxu0
    %612 = vmatprep.mubr.bf16.mxu0 0
    %613 = vmatmul.mubr.bf16.gmra.mrb[0].mxu0 %v416
    %v614 = vpop.f32.mrb[0].mxu0
    %v615 = vadd.f32 %v442, %v614
    %v616 = vpop.f32.mrb[0].mxu0
    %v617 = vpop.f32.mrb[0].mxu0
    %v618 = vadd.f32 %v442, %v617
    %v619 = vpop.f32.mrb[0].mxu0
    %620 = vmatprep.mubr.bf16.mxu0 0
    %621 = vmatmul.mubr.bf16.gmra.mrb[0].mxu0 %v417
    %v622 = vpop.f32.mrb[0].mxu0
    %v623 = vadd.f32 %v442, %v622
    %v624 = vpop.f32.mrb[0].mxu0
    %v625 = vpop.f32.mrb[0].mxu0
    %v626 = vadd.f32 %v442, %v625
    %v627 = vpop.f32.mrb[0].mxu0
    %628 = vmatprep.mubr.bf16.mxu0 0
    %629 = vmatmul.mubr.bf16.gmra.mrb[0].mxu0 %v418
    %v630 = vpop.f32.mrb[0].mxu0
    %v631 = vadd.f32 %v442, %v630
    %v632 = vpop.f32.mrb[0].mxu0
    %v633 = vpop.f32.mrb[0].mxu0
    %v634 = vadd.f32 %v442, %v633
    %v635 = vpop.f32.mrb[0].mxu0
    %636 = vmatprep.mubr.bf16.mxu0 0
    %637 = vmatmul.mubr.bf16.gmra.mrb[0].mxu0 %v419
    %v638 = vpop.f32.mrb[0].mxu0
    %v639 = vadd.f32 %v442, %v638
    %v640 = vpop.f32.mrb[0].mxu0
    %v641 = vpop.f32.mrb[0].mxu0
    %v642 = vadd.f32 %v442, %v641
    %v643 = vpop.f32.mrb[0].mxu0
    %644 = vmatprep.mubr.bf16.mxu0 0
    %645 = vmatmul.mubr.bf16.gmra.mrb[0].mxu0 %v420
    %v646 = vpop.f32.mrb[0].mxu0
    %v647 = vadd.f32 %v442, %v646
    %v648 = vpop.f32.mrb[0].mxu0
    %v649 = vpop.f32.mrb[0].mxu0
    %v650 = vadd.f32 %v442, %v649
    %v651 = vpop.f32.mrb[0].mxu0
    %652 = vdwg.mxu0
    %vm653 = vcmp.ge.f32.partialorder %v527, 0.0
    %vm654 = vcmp.ge.f32.partialorder %v530, 0.0
    %vm655 = vcmp.ge.f32.partialorder %v535, 0.0
    %vm656 = vcmp.ge.f32.partialorder %v538, 0.0
    %vm657 = vcmp.ge.f32.partialorder %v543, 0.0
    %vm658 = vcmp.ge.f32.partialorder %v546, 0.0
    %vm659 = vcmp.ge.f32.partialorder %v551, 0.0
    %vm660 = vcmp.ge.f32.partialorder %v554, 0.0
    %vm661 = vcmp.ge.f32.partialorder %v559, 0.0
    %vm662 = vcmp.ge.f32.partialorder %v562, 0.0
    %vm663 = vcmp.ge.f32.partialorder %v567, 0.0
    %vm664 = vcmp.ge.f32.partialorder %v570, 0.0
    %vm665 = vcmp.ge.f32.partialorder %v575, 0.0
    %vm666 = vcmp.ge.f32.partialorder %v578, 0.0
    %vm667 = vcmp.ge.f32.partialorder %v583, 0.0
    %vm668 = vcmp.ge.f32.partialorder %v586, 0.0
    %vm669 = vcmp.ge.f32.partialorder %v591, 0.0
    %vm670 = vcmp.ge.f32.partialorder %v594, 0.0
    %vm671 = vcmp.ge.f32.partialorder %v599, 0.0
    %vm672 = vcmp.ge.f32.partialorder %v602, 0.0
    %vm673 = vcmp.ge.f32.partialorder %v607, 0.0
    %vm674 = vcmp.ge.f32.partialorder %v610, 0.0
    %vm675 = vcmp.ge.f32.partialorder %v615, 0.0
    %vm676 = vcmp.ge.f32.partialorder %v618, 0.0
    %vm677 = vcmp.ge.f32.partialorder %v623, 0.0
    %vm678 = vcmp.ge.f32.partialorder %v626, 0.0
    %vm679 = vcmp.ge.f32.partialorder %v631, 0.0
    %vm680 = vcmp.ge.f32.partialorder %v634, 0.0
    %vm681 = vcmp.ge.f32.partialorder %v639, 0.0
    %vm682 = vcmp.ge.f32.partialorder %v642, 0.0
    %vm683 = vcmp.ge.f32.partialorder %v647, 0.0
    %vm684 = vcmp.ge.f32.partialorder %v650, 0.0
    %v685 = vmul.f32 %v527, 0.15
    %v686 = vmul.f32 %v530, 0.15
    %v687 = vmul.f32 %v535, 0.15
    %v688 = vmul.f32 %v538, 0.15
    %v689 = vmul.f32 %v543, 0.15
    %v690 = vmul.f32 %v546, 0.15
    %v691 = vmul.f32 %v551, 0.15
    %v692 = vmul.f32 %v554, 0.15
    %v693 = vmul.f32 %v559, 0.15
    %v694 = vmul.f32 %v562, 0.15
    %v695 = vmul.f32 %v567, 0.15
    %v696 = vmul.f32 %v570, 0.15
    %v697 = vmul.f32 %v575, 0.15
    %v698 = vmul.f32 %v578, 0.15
    %v699 = vmul.f32 %v583, 0.15
    %v700 = vmul.f32 %v586, 0.15
    %v701 = vmul.f32 %v591, 0.15
    %v702 = vmul.f32 %v594, 0.15
    %v703 = vmul.f32 %v599, 0.15
    %v704 = vmul.f32 %v602, 0.15
    %v705 = vmul.f32 %v607, 0.15
    %v706 = vmul.f32 %v610, 0.15
    %v707 = vmul.f32 %v615, 0.15
    %v708 = vmul.f32 %v618, 0.15
    %v709 = vmul.f32 %v623, 0.15
    %v710 = vmul.f32 %v626, 0.15
    %v711 = vmul.f32 %v631, 0.15
    %v712 = vmul.f32 %v634, 0.15
    %v713 = vmul.f32 %v639, 0.15
    %v714 = vmul.f32 %v642, 0.15
    %v715 = vmul.f32 %v647, 0.15
    %v716 = vmul.f32 %v650, 0.15
    %v717 = vsel %vm653, %v527, %v685
    %v718 = vsel %vm654, %v530, %v686
    %v719 = vsel %vm655, %v535, %v687
    %v720 = vsel %vm656, %v538, %v688
    %v721 = vsel %vm657, %v543, %v689
    %v722 = vsel %vm658, %v546, %v690
    %v723 = vsel %vm659, %v551, %v691
    %v724 = vsel %vm660, %v554, %v692
    %v725 = vsel %vm661, %v559, %v693
    %v726 = vsel %vm662, %v562, %v694
    %v727 = vsel %vm663, %v567, %v695
    %v728 = vsel %vm664, %v570, %v696
    %v729 = vsel %vm665, %v575, %v697
    %v730 = vsel %vm666, %v578, %v698
    %v731 = vsel %vm667, %v583, %v699
    %v732 = vsel %vm668, %v586, %v700
    %v733 = vsel %vm669, %v591, %v701
    %v734 = vsel %vm670, %v594, %v702
    %v735 = vsel %vm671, %v599, %v703
    %v736 = vsel %vm672, %v602, %v704
    %v737 = vsel %vm673, %v607, %v705
    %v738 = vsel %vm674, %v610, %v706
    %v739 = vsel %vm675, %v615, %v707
    %v740 = vsel %vm676, %v618, %v708
    %v741 = vsel %vm677, %v623, %v709
    %v742 = vsel %vm678, %v626, %v710
    %v743 = vsel %vm679, %v631, %v711
    %v744 = vsel %vm680, %v634, %v712
    %v745 = vsel %vm681, %v639, %v713
    %v746 = vsel %vm682, %v642, %v714
    %v747 = vsel %vm683, %v647, %v715
    %v748 = vsel %vm684, %v650, %v716
    %v749 = vpack.c.bf16 %v718, %v717
    %v750 = vpack.c.bf16 %v720, %v719
    %v751 = vpack.c.bf16 %v722, %v721
    %v752 = vpack.c.bf16 %v724, %v723
    %v753 = vpack.c.bf16 %v726, %v725
    %v754 = vpack.c.bf16 %v728, %v727
    %v755 = vpack.c.bf16 %v730, %v729
    %v756 = vpack.c.bf16 %v732, %v731
    %v757 = vpack.c.bf16 %v734, %v733
    %v758 = vpack.c.bf16 %v736, %v735
    %v759 = vpack.c.bf16 %v738, %v737
    %v760 = vpack.c.bf16 %v740, %v739
    %v761 = vpack.c.bf16 %v742, %v741
    %v762 = vpack.c.bf16 %v744, %v743
    %v763 = vpack.c.bf16 %v746, %v745
    %v764 = vpack.c.bf16 %v748, %v747
    %v765 = vld [vmem:[%s5] sm:$0xf]
    %v766 = vld [vmem:[%s5 + $0x4] sm:$0xf]
    %v767 = vld [vmem:[%s5 + $0x8] sm:$0xf]
    %v768 = vld [vmem:[%s5 + $0xc] sm:$0xf]
    %v769 = vld [vmem:[%s5 + $0x10] sm:$0xf]
    %v770 = vld [vmem:[%s5 + $0x14] sm:$0xf]
    %v771 = vld [vmem:[%s5 + $0x18] sm:$0xf]
    %v772 = vld [vmem:[%s5 + $0x1c] sm:$0xf]
    %v773 = vld [vmem:[%s5 + $0x20] sm:$0xf]
    %v774 = vld [vmem:[%s5 + $0x24] sm:$0xf]
    %v775 = vld [vmem:[%s5 + $0x28] sm:$0xf]
    %v776 = vld [vmem:[%s5 + $0x2c] sm:$0xf]
    %v777 = vld [vmem:[%s5 + $0x30] sm:$0xf]
    %v778 = vld [vmem:[%s5 + $0x34] sm:$0xf]
    %v779 = vld [vmem:[%s5 + $0x38] sm:$0xf]
    %v780 = vld [vmem:[%s5 + $0x3c] sm:$0xf]
    %v781 = vld [vmem:[%s6] sm:$0x1]
    %v783 = vlaneseq
    %v784 = vshrl.u32 %v783, 7
    %v785 = vsub.s32 0, %v784
    %v786 = vrot.slane %v781, %v785
    %v804 = vunpack.c.l.b16 %v765
    %v805 = vunpack.c.l.b16 %v766
    %v806 = vunpack.c.l.b16 %v767
    %v807 = vunpack.c.l.b16 %v768
    %v808 = vunpack.c.l.b16 %v769
    %v809 = vunpack.c.l.b16 %v770
    %v810 = vunpack.c.l.b16 %v771
    %v811 = vunpack.c.l.b16 %v772
    %v812 = vunpack.c.l.b16 %v773
    %v813 = vunpack.c.l.b16 %v774
    %v814 = vunpack.c.l.b16 %v775
    %v815 = vunpack.c.l.b16 %v776
    %v816 = vunpack.c.l.b16 %v777
    %v817 = vunpack.c.l.b16 %v778
    %v818 = vunpack.c.l.b16 %v779
    %v819 = vunpack.c.l.b16 %v780
    %v820 = vpack.c.b16 %v805, %v804
    %v821 = vpack.c.b16 %v807, %v806
    %v822 = vpack.c.b16 %v809, %v808
    %v823 = vpack.c.b16 %v811, %v810
    %v824 = vpack.c.b16 %v813, %v812
    %v825 = vpack.c.b16 %v815, %v814
    %v826 = vpack.c.b16 %v817, %v816
    %v827 = vpack.c.b16 %v819, %v818
    %836 = vmatprep.subr.bf16.mxu0 0
    %837 = vmatpush1.bf16.msra.mxu0 %v820
    %838 = vmatprep.subr.bf16.mxu0 0
    %839 = vmatpush1.bf16.msra.mxu0 %v821
    %840 = vmatprep.subr.bf16.mxu0 0
    %841 = vmatpush1.bf16.msra.mxu0 %v822
    %842 = vmatprep.subr.bf16.mxu0 0
    %843 = vmatpush1.bf16.msra.mxu0 %v823
    %844 = vmatprep.subr.bf16.mxu0 0
    %845 = vmatpush1.bf16.msra.mxu0 %v824
    %846 = vmatprep.subr.bf16.mxu0 0
    %847 = vmatpush1.bf16.msra.mxu0 %v825
    %848 = vmatprep.subr.bf16.mxu0 0
    %849 = vmatpush1.bf16.msra.mxu0 %v826
    %850 = vmatprep.subr.bf16.mxu0 0
    %851 = vmatpush1.bf16.msra.mxu0 %v827
    %852 = vmatprep.subr.bf16.mxu0 0
    %853 = vmatpush1.bf16.msra.mxu0 0
    %854 = vmatprep.subr.bf16.mxu0 0
    %855 = vmatpush1.bf16.msra.mxu0 0
    %856 = vmatprep.subr.bf16.mxu0 0
    %857 = vmatpush1.bf16.msra.mxu0 0
    %858 = vmatprep.subr.bf16.mxu0 0
    %859 = vmatpush1.bf16.msra.mxu0 0
    %860 = vmatprep.subr.bf16.mxu0 0
    %861 = vmatpush1.bf16.msra.mxu0 0
    %862 = vmatprep.subr.bf16.mxu0 0
    %863 = vmatpush1.bf16.msra.mxu0 0
    %864 = vmatprep.subr.bf16.mxu0 0
    %865 = vmatpush1.bf16.msra.mxu0 0
    %866 = vmatprep.subr.bf16.mxu0 0
    %867 = vmatpush1.bf16.msra.mxu0 0
    %868 = vmatprep.mubr.bf16.mxu0 0
    %869 = vmatmul.mubr.bf16.gmra.mrb[0].mxu0 %v749
    %v870 = vpop.f32.mrb[0].mxu0
    %v871 = vadd.f32 %v786, %v870
    %v872 = vpop.f32.mrb[0].mxu0
    %v873 = vpop.f32.mrb[0].mxu0
    %v874 = vadd.f32 %v786, %v873
    %v875 = vpop.f32.mrb[0].mxu0
    %876 = vmatprep.mubr.bf16.mxu0 0
    %877 = vmatmul.mubr.bf16.gmra.mrb[0].mxu0 %v750
    %v878 = vpop.f32.mrb[0].mxu0
    %v879 = vadd.f32 %v786, %v878
    %v880 = vpop.f32.mrb[0].mxu0
    %v881 = vpop.f32.mrb[0].mxu0
    %v882 = vadd.f32 %v786, %v881
    %v883 = vpop.f32.mrb[0].mxu0
    %884 = vmatprep.mubr.bf16.mxu0 0
    %885 = vmatmul.mubr.bf16.gmra.mrb[0].mxu0 %v751
    %v886 = vpop.f32.mrb[0].mxu0
    %v887 = vadd.f32 %v786, %v886
    %v888 = vpop.f32.mrb[0].mxu0
    %v889 = vpop.f32.mrb[0].mxu0
    %v890 = vadd.f32 %v786, %v889
    %v891 = vpop.f32.mrb[0].mxu0
    %892 = vmatprep.mubr.bf16.mxu0 0
    %893 = vmatmul.mubr.bf16.gmra.mrb[0].mxu0 %v752
    %v894 = vpop.f32.mrb[0].mxu0
    %v895 = vadd.f32 %v786, %v894
    %v896 = vpop.f32.mrb[0].mxu0
    %v897 = vpop.f32.mrb[0].mxu0
    %v898 = vadd.f32 %v786, %v897
    %v899 = vpop.f32.mrb[0].mxu0
    %900 = vmatprep.mubr.bf16.mxu0 0
    %901 = vmatmul.mubr.bf16.gmra.mrb[0].mxu0 %v753
    %v902 = vpop.f32.mrb[0].mxu0
    %v903 = vadd.f32 %v786, %v902
    %v904 = vpop.f32.mrb[0].mxu0
    %v905 = vpop.f32.mrb[0].mxu0
    %v906 = vadd.f32 %v786, %v905
    %v907 = vpop.f32.mrb[0].mxu0
    %908 = vmatprep.mubr.bf16.mxu0 0
    %909 = vmatmul.mubr.bf16.gmra.mrb[0].mxu0 %v754
    %v910 = vpop.f32.mrb[0].mxu0
    %v911 = vadd.f32 %v786, %v910
    %v912 = vpop.f32.mrb[0].mxu0
    %v913 = vpop.f32.mrb[0].mxu0
    %v914 = vadd.f32 %v786, %v913
    %v915 = vpop.f32.mrb[0].mxu0
    %916 = vmatprep.mubr.bf16.mxu0 0
    %917 = vmatmul.mubr.bf16.gmra.mrb[0].mxu0 %v755
    %v918 = vpop.f32.mrb[0].mxu0
    %v919 = vadd.f32 %v786, %v918
    %v920 = vpop.f32.mrb[0].mxu0
    %v921 = vpop.f32.mrb[0].mxu0
    %v922 = vadd.f32 %v786, %v921
    %v923 = vpop.f32.mrb[0].mxu0
    %924 = vmatprep.mubr.bf16.mxu0 0
    %925 = vmatmul.mubr.bf16.gmra.mrb[0].mxu0 %v756
    %v926 = vpop.f32.mrb[0].mxu0
    %v927 = vadd.f32 %v786, %v926
    %v928 = vpop.f32.mrb[0].mxu0
    %v929 = vpop.f32.mrb[0].mxu0
    %v930 = vadd.f32 %v786, %v929
    %v931 = vpop.f32.mrb[0].mxu0
    %932 = vmatprep.mubr.bf16.mxu0 0
    %933 = vmatmul.mubr.bf16.gmra.mrb[0].mxu0 %v757
    %v934 = vpop.f32.mrb[0].mxu0
    %v935 = vadd.f32 %v786, %v934
    %v936 = vpop.f32.mrb[0].mxu0
    %v937 = vpop.f32.mrb[0].mxu0
    %v938 = vadd.f32 %v786, %v937
    %v939 = vpop.f32.mrb[0].mxu0
    %940 = vmatprep.mubr.bf16.mxu0 0
    %941 = vmatmul.mubr.bf16.gmra.mrb[0].mxu0 %v758
    %v942 = vpop.f32.mrb[0].mxu0
    %v943 = vadd.f32 %v786, %v942
    %v944 = vpop.f32.mrb[0].mxu0
    %v945 = vpop.f32.mrb[0].mxu0
    %v946 = vadd.f32 %v786, %v945
    %v947 = vpop.f32.mrb[0].mxu0
    %948 = vmatprep.mubr.bf16.mxu0 0
    %949 = vmatmul.mubr.bf16.gmra.mrb[0].mxu0 %v759
    %v950 = vpop.f32.mrb[0].mxu0
    %v951 = vadd.f32 %v786, %v950
    %v952 = vpop.f32.mrb[0].mxu0
    %v953 = vpop.f32.mrb[0].mxu0
    %v954 = vadd.f32 %v786, %v953
    %v955 = vpop.f32.mrb[0].mxu0
    %956 = vmatprep.mubr.bf16.mxu0 0
    %957 = vmatmul.mubr.bf16.gmra.mrb[0].mxu0 %v760
    %v958 = vpop.f32.mrb[0].mxu0
    %v959 = vadd.f32 %v786, %v958
    %v960 = vpop.f32.mrb[0].mxu0
    %v961 = vpop.f32.mrb[0].mxu0
    %v962 = vadd.f32 %v786, %v961
    %v963 = vpop.f32.mrb[0].mxu0
    %964 = vmatprep.mubr.bf16.mxu0 0
    %965 = vmatmul.mubr.bf16.gmra.mrb[0].mxu0 %v761
    %v966 = vpop.f32.mrb[0].mxu0
    %v967 = vadd.f32 %v786, %v966
    %v968 = vpop.f32.mrb[0].mxu0
    %v969 = vpop.f32.mrb[0].mxu0
    %v970 = vadd.f32 %v786, %v969
    %v971 = vpop.f32.mrb[0].mxu0
    %972 = vmatprep.mubr.bf16.mxu0 0
    %973 = vmatmul.mubr.bf16.gmra.mrb[0].mxu0 %v762
    %v974 = vpop.f32.mrb[0].mxu0
    %v975 = vadd.f32 %v786, %v974
    %v976 = vpop.f32.mrb[0].mxu0
    %v977 = vpop.f32.mrb[0].mxu0
    %v978 = vadd.f32 %v786, %v977
    %v979 = vpop.f32.mrb[0].mxu0
    %980 = vmatprep.mubr.bf16.mxu0 0
    %981 = vmatmul.mubr.bf16.gmra.mrb[0].mxu0 %v763
    %v982 = vpop.f32.mrb[0].mxu0
    %v983 = vadd.f32 %v786, %v982
    %v984 = vpop.f32.mrb[0].mxu0
    %v985 = vpop.f32.mrb[0].mxu0
    %v986 = vadd.f32 %v786, %v985
    %v987 = vpop.f32.mrb[0].mxu0
    %988 = vmatprep.mubr.bf16.mxu0 0
    %989 = vmatmul.mubr.bf16.gmra.mrb[0].mxu0 %v764
    %v990 = vpop.f32.mrb[0].mxu0
    %v991 = vadd.f32 %v786, %v990
    %v992 = vpop.f32.mrb[0].mxu0
    %v993 = vpop.f32.mrb[0].mxu0
    %v994 = vadd.f32 %v786, %v993
    %v995 = vpop.f32.mrb[0].mxu0
    %996 = vdwg.mxu0
    %997 = vst [vmem:[#allocation2] sm:$0xff] %v871
    %998 = vst [vmem:[#allocation2 + $0x8] sm:$0xff] %v874
    %999 = vst [vmem:[#allocation2 + $0x10] sm:$0xff] %v879
    %1000 = vst [vmem:[#allocation2 + $0x18] sm:$0xff] %v882
    %1001 = vst [vmem:[#allocation2 + $0x20] sm:$0xff] %v887
    %1002 = vst [vmem:[#allocation2 + $0x28] sm:$0xff] %v890
    %1003 = vst [vmem:[#allocation2 + $0x30] sm:$0xff] %v895
    %1004 = vst [vmem:[#allocation2 + $0x38] sm:$0xff] %v898
    %1005 = vst [vmem:[#allocation2 + $0x40] sm:$0xff] %v903
    %1006 = vst [vmem:[#allocation2 + $0x48] sm:$0xff] %v906
    %1007 = vst [vmem:[#allocation2 + $0x50] sm:$0xff] %v911
    %1008 = vst [vmem:[#allocation2 + $0x58] sm:$0xff] %v914
    %1009 = vst [vmem:[#allocation2 + $0x60] sm:$0xff] %v919
    %1010 = vst [vmem:[#allocation2 + $0x68] sm:$0xff] %v922
    %1011 = vst [vmem:[#allocation2 + $0x70] sm:$0xff] %v927
    %1012 = vst [vmem:[#allocation2 + $0x78] sm:$0xff] %v930
    %1013 = vst [vmem:[#allocation2 + $0x80] sm:$0xff] %v935
    %1014 = vst [vmem:[#allocation2 + $0x88] sm:$0xff] %v938
    %1015 = vst [vmem:[#allocation2 + $0x90] sm:$0xff] %v943
    %1016 = vst [vmem:[#allocation2 + $0x98] sm:$0xff] %v946
    %1017 = vst [vmem:[#allocation2 + $0xa0] sm:$0xff] %v951
    %1018 = vst [vmem:[#allocation2 + $0xa8] sm:$0xff] %v954
    %1019 = vst [vmem:[#allocation2 + $0xb0] sm:$0xff] %v959
    %1020 = vst [vmem:[#allocation2 + $0xb8] sm:$0xff] %v962
    %1021 = vst [vmem:[#allocation2 + $0xc0] sm:$0xff] %v967
    %1022 = vst [vmem:[#allocation2 + $0xc8] sm:$0xff] %v970
    %1023 = vst [vmem:[#allocation2 + $0xd0] sm:$0xff] %v975
    %1024 = vst [vmem:[#allocation2 + $0xd8] sm:$0xff] %v978
    %1025 = vst [vmem:[#allocation2 + $0xe0] sm:$0xff] %v983
    %1026 = vst [vmem:[#allocation2 + $0xe8] sm:$0xff] %v986
    %1027 = vst [vmem:[#allocation2 + $0xf0] sm:$0xff] %v991
    %1028 = vst [vmem:[#allocation2 + $0xf8] sm:$0xff] %v994
    // Predicated region
    $region30: #{tpu_custom_call.1} parent=1 // pred_check
      _
    $region31: #{tpu_custom_call.1} parent=1 // pred_check_branch
      %1030 = sbr.rel (0) target = $region33
    $region32: #{tpu_custom_call.1} parent=1 // pred_region
      %s1032 = ssub.s32 4096, 4096
      %1033 = vsyncadd [#allocation3], %s1032
      %s1034 = sshll.u32 [#allocation2], 4
      %s1035 = int_to_ptr.vmem [resolvable:$true] %s1034
      %1040 = dma.vmem_to_hbm [thread:$0]  %s1035, 4096, %s7, [#allocation3], 128, 128, 8
    $region33: #{tpu_custom_call.1} parent=1 // pred_fallthru
      _
    // Predicated region
    $region34: #{tpu_custom_call.1} parent=1 // pred_check
      _
    $region35: #{tpu_custom_call.1} parent=1 // pred_check_branch
      %1042 = sbr.rel (0) target = $region37
    $region36: #{tpu_custom_call.1} parent=1 // pred_region
      %1043 = dma.done [#allocation3], 4096
    $region37: #{tpu_custom_call.1} parent=1 // pred_fallthru
      _
    %1044 = vsyncpa [#allocation3], 1

</llo_original>
